<compile_context>
chip_gen: v6e
topology: v6e:2x2x1
jax: 0.10.0
libtpu: 0.0.40
codegen_flags: <defaults>
</compile_context>

<pallas_src>
import functools

import jax
import jax.numpy as jnp
from jax import lax
from jax.experimental import pallas as pl
from jax.experimental.pallas import tpu as pltpu

EPS = 1e-6
MASK_VALUE = -1e30           # dtype-safe "-inf": exp underflows to exactly 0
VMEM_LIMIT = 64 * 1024 * 1024


def _tile(dim, target, align=1):
    """Largest divisor of `dim` <= target that is a multiple of `align`
    (full dim is always legal when dim <= target)."""
    if dim <= target:
        return dim
    best = None
    for t in range(target, 0, -1):
        if dim % t == 0:
            if t % align == 0:
                return t
            if best is None:
                best = t
    return best


# ----------------------------------------------------------------------------- #
# Tiled matmul with the residual add fused into the final-K epilogue.
# ----------------------------------------------------------------------------- #
def _mm_res_kernel(x_ref, w_ref, r_ref, o_ref, acc_ref):
    @pl.when(pl.program_id(2) == 0)
    def _init():
        acc_ref[...] = jnp.zeros_like(acc_ref)

    acc_ref[...] += jnp.dot(x_ref[...], w_ref[...],
                            preferred_element_type=jnp.float32)

    @pl.when(pl.program_id(2) == pl.num_programs(2) - 1)
    def _fin():
        o_ref[...] = (acc_ref[...] + r_ref[...].astype(jnp.float32)
                      ).astype(o_ref.dtype)


def matmul_residual(x2d, w, res2d, out_dtype=jnp.float32, tm=256, tn=512, tk=512):
    """[N,K](bf16) @ [K,F](bf16) + res[N,F](f32) -> [N,F](out_dtype)."""
    N, K = x2d.shape
    F = w.shape[1]
    tm, tn, tk = _tile(N, tm, 8), _tile(F, tn, 128), _tile(K, tk, 128)
    # TODO(synk): on v6e consider pipeline_mode=pl.Buffered(3) on the weight spec.
    return pl.pallas_call(
        _mm_res_kernel,
        out_shape=jax.ShapeDtypeStruct((N, F), out_dtype),
        grid=(N // tm, F // tn, K // tk),
        in_specs=[
            pl.BlockSpec((tm, tk), lambda i, j, k: (i, k)),
            pl.BlockSpec((tk, tn), lambda i, j, k: (k, j)),
            pl.BlockSpec((tm, tn), lambda i, j, k: (i, j)),
        ],
        out_specs=pl.BlockSpec((tm, tn), lambda i, j, k: (i, j)),
        scratch_shapes=[pltpu.VMEM((tm, tn), jnp.float32)],
        compiler_params=pltpu.CompilerParams(
            dimension_semantics=("parallel", "parallel", "arbitrary"),
            vmem_limit_bytes=VMEM_LIMIT),
    )(x2d, w, res2d)


# ----------------------------------------------------------------------------- #
# Fused RMSNorm + matmul (full K per block; the norm needs the whole hidden dim).
# ----------------------------------------------------------------------------- #
def _norm_mm_kernel(x_ref, g_ref, w_ref, o_ref):
    x = x_ref[...].astype(jnp.float32)
    var = jnp.mean(x * x, axis=-1, keepdims=True)
    xn = (x * lax.rsqrt(var + EPS)) * g_ref[...].astype(jnp.float32)
    o_ref[...] = jnp.dot(xn.astype(jnp.bfloat16), w_ref[...],
                         preferred_element_type=jnp.float32).astype(o_ref.dtype)


def rmsnorm_matmul(x, g, w, out_dtype=jnp.bfloat16, tm=256, tn=512):
    lead, K = x.shape[:-1], x.shape[-1]
    x2 = x.reshape(-1, K)
    N, F = x2.shape[0], w.shape[1]
    tm, tn = _tile(N, tm, 8), _tile(F, tn, 128)
    out = pl.pallas_call(
        _norm_mm_kernel,
        out_shape=jax.ShapeDtypeStruct((N, F), out_dtype),
        grid=(N // tm, F // tn),
        in_specs=[
            pl.BlockSpec((tm, K), lambda i, j: (i, 0)),
            pl.BlockSpec((1, K), lambda i, j: (0, 0)),
            pl.BlockSpec((K, tn), lambda i, j: (0, j)),
        ],
        out_specs=pl.BlockSpec((tm, tn), lambda i, j: (i, j)),
        compiler_params=pltpu.CompilerParams(
            dimension_semantics=("parallel", "parallel"),
            vmem_limit_bytes=VMEM_LIMIT),
    )(x2, g.reshape(1, K), w)
    return out.reshape(*lead, F)


# ----------------------------------------------------------------------------- #
# Fused RMSNorm + gate/up projections + SwiGLU (single pallas_call).
# ----------------------------------------------------------------------------- #
def _norm_swiglu_kernel(x_ref, g_ref, wg_ref, wu_ref, o_ref):
    x = x_ref[...].astype(jnp.float32)
    var = jnp.mean(x * x, axis=-1, keepdims=True)
    xn = ((x * lax.rsqrt(var + EPS)) * g_ref[...].astype(jnp.float32)
          ).astype(jnp.bfloat16)
    gate = jnp.dot(xn, wg_ref[...], preferred_element_type=jnp.float32)
    up = jnp.dot(xn, wu_ref[...], preferred_element_type=jnp.float32)
    o_ref[...] = (gate * jax.nn.sigmoid(gate) * up).astype(o_ref.dtype)


def norm_swiglu(x, g, wg, wu, out_dtype=jnp.bfloat16, tm=256, tf=512):
    lead, K = x.shape[:-1], x.shape[-1]
    x2 = x.reshape(-1, K)
    N, F = x2.shape[0], wg.shape[1]
    tm, tf = _tile(N, tm, 8), _tile(F, tf, 128)
    out = pl.pallas_call(
        _norm_swiglu_kernel,
        out_shape=jax.ShapeDtypeStruct((N, F), out_dtype),
        grid=(N // tm, F // tf),
        in_specs=[
            pl.BlockSpec((tm, K), lambda i, j: (i, 0)),
            pl.BlockSpec((1, K), lambda i, j: (0, 0)),
            pl.BlockSpec((K, tf), lambda i, j: (0, j)),
            pl.BlockSpec((K, tf), lambda i, j: (0, j)),
        ],
        out_specs=pl.BlockSpec((tm, tf), lambda i, j: (i, j)),
        compiler_params=pltpu.CompilerParams(
            dimension_semantics=("parallel", "parallel"),
            vmem_limit_bytes=VMEM_LIMIT),
    )(x2, g.reshape(1, K), wg, wu)
    return out.reshape(*lead, F)


# ----------------------------------------------------------------------------- #
# Flash attention: grid (B, H, q_tiles, kv_tiles), online softmax, RoPE fused.
# Keys 0..M-1 are the memory prefix (always visible); chunk keys are causal.
# ----------------------------------------------------------------------------- #
def _rope(x, cos, sin, half, use_roll):
    if use_roll:
        sign = jnp.where(
            lax.broadcasted_iota(jnp.int32, x.shape, 1) < half, -1.0, 1.0)
        x_rot = pltpu.roll(x, half, axis=-1) * sign      # XLU, free-ish
    else:
        x_rot = jnp.concatenate([-x[:, half:], x[:, :half]], axis=-1)
    return x * cos + x_rot * sin


def _flash_kernel(q_ref, k_ref, v_ref, cq_ref, sq_ref, ck_ref, sk_ref,
                  o_ref, m_sc, l_sc, acc_sc, *, mem_len, tq, tkv, half, use_roll):
    qi = pl.program_id(2)
    ki = pl.program_id(3)

    @pl.when(ki == 0)
    def _init():
        m_sc[...] = jnp.full_like(m_sc, MASK_VALUE)
        l_sc[...] = jnp.zeros_like(l_sc)
        acc_sc[...] = jnp.zeros_like(acc_sc)

    # RoPE in f32 (v5e-safe); softmax scale is pre-folded into cos_q/sin_q.
    q = _rope(q_ref[0, 0].astype(jnp.float32), cq_ref[...], sq_ref[...],
              half, use_roll).astype(jnp.bfloat16)              # [tq, dh]
    k = _rope(k_ref[0, 0].astype(jnp.float32), ck_ref[...], sk_ref[...],
              half, use_roll).astype(jnp.bfloat16)              # [tkv, dh]
    v = v_ref[0, 0]                                             # [tkv, dh] bf16

    s = lax.dot_general(q, k, (((1,), (1,)), ((), ())),
                        preferred_element_type=jnp.float32)     # [tq, tkv]

    # visibility: key_pos <= query_pos covers both memory (always) and causal chunk
    q_pos = mem_len + qi * tq + lax.broadcasted_iota(jnp.int32, (tq, tkv), 0)
    k_pos = ki * tkv + lax.broadcasted_iota(jnp.int32, (tq, tkv), 1)
    s = jnp.where(k_pos <= q_pos, s, MASK_VALUE)

    m_prev = m_sc[...]
    m_new = jnp.maximum(m_prev, jnp.max(s, axis=-1, keepdims=True))
    alpha = jnp.exp(m_prev - m_new)
    p = jnp.exp(s - m_new)
    l_sc[...] = alpha * l_sc[...] + jnp.sum(p, axis=-1, keepdims=True)
    acc_sc[...] = alpha * acc_sc[...] + jnp.dot(
        p.astype(jnp.bfloat16), v, preferred_element_type=jnp.float32)
    m_sc[...] = m_new

    @pl.when(ki == pl.num_programs(3) - 1)
    def _fin():
        o_ref[0, 0] = (acc_sc[...] * pl.reciprocal(l_sc[...], approx=True)
                       ).astype(o_ref.dtype)


def flash_attention(q, k, v, cos_q, sin_q, cos_k, sin_k, mem_len,
                    tq_target=256, tkv_target=512):
    """q: [B,H,S,dh] bf16, k/v: [B,H,T,dh] bf16 (T = mem_len + S) -> [B,H,S,dh]."""
    B, H, S, dh = q.shape
    T = k.shape[2]
    tq = _tile(S, tq_target, 8)
    tkv = _tile(T, tkv_target, 8)
    kern = functools.partial(_flash_kernel, mem_len=mem_len, tq=tq, tkv=tkv,
                             half=dh // 2, use_roll=(dh % 128 == 0))
    return pl.pallas_call(
        kern,
        out_shape=jax.ShapeDtypeStruct((B, H, S, dh), jnp.bfloat16),
        grid=(B, H, S // tq, T // tkv),
        in_specs=[
            pl.BlockSpec((1, 1, tq, dh), lambda b, h, i, j: (b, h, i, 0)),
            pl.BlockSpec((1, 1, tkv, dh), lambda b, h, i, j: (b, h, j, 0)),
            pl.BlockSpec((1, 1, tkv, dh), lambda b, h, i, j: (b, h, j, 0)),
            pl.BlockSpec((tq, dh), lambda b, h, i, j: (i, 0)),
            pl.BlockSpec((tq, dh), lambda b, h, i, j: (i, 0)),
            pl.BlockSpec((tkv, dh), lambda b, h, i, j: (j, 0)),
            pl.BlockSpec((tkv, dh), lambda b, h, i, j: (j, 0)),
        ],
        out_specs=pl.BlockSpec((1, 1, tq, dh), lambda b, h, i, j: (b, h, i, 0)),
        scratch_shapes=[pltpu.VMEM((tq, 1), jnp.float32),
                        pltpu.VMEM((tq, 1), jnp.float32),
                        pltpu.VMEM((tq, dh), jnp.float32)],
        compiler_params=pltpu.CompilerParams(
            dimension_semantics=("parallel", "parallel", "parallel", "arbitrary")),
    )(q, k, v, cos_q, sin_q, cos_k, sin_k)


# ----------------------------------------------------------------------------- #
# Fused final-RMSNorm + LM head + cross-entropy (online logsumexp over vocab tiles,
# gold-logit gather from a per-row labels column).  Logits written once, never
# re-read for the loss.
# ----------------------------------------------------------------------------- #
def _lmhead_loss_kernel(x_ref, g_ref, w_ref, lab_ref, logits_ref, nll_ref,
                        xn_sc, m_sc, s_sc, gold_sc, *, tn):
    j = pl.program_id(1)

    @pl.when(j == 0)
    def _init():
        x = x_ref[...].astype(jnp.float32)
        var = jnp.mean(x * x, axis=-1, keepdims=True)
        xn_sc[...] = ((x * lax.rsqrt(var + EPS)) * g_ref[...].astype(jnp.float32)
                      ).astype(jnp.bfloat16)
        m_sc[...] = jnp.full_like(m_sc, MASK_VALUE)
        s_sc[...] = jnp.zeros_like(s_sc)
        gold_sc[...] = jnp.zeros_like(gold_sc)

    logits = jnp.dot(xn_sc[...], w_ref[...], preferred_element_type=jnp.float32)
    logits_ref[...] = logits.astype(logits_ref.dtype)

    # online logsumexp across vocab tiles
    m_prev = m_sc[...]
    m_new = jnp.maximum(m_prev, jnp.max(logits, axis=-1, keepdims=True))
    alpha = jnp.exp(m_prev - m_new)
    s_sc[...] = alpha * s_sc[...] + jnp.sum(jnp.exp(logits - m_new),
                                            axis=-1, keepdims=True)
    m_sc[...] = m_new

    # gold logit gather (label == -1 rows never match; masked out in JAX)
    col = j * tn + lax.broadcasted_iota(jnp.int32, logits.shape, 1)
    gold_sc[...] += jnp.sum(jnp.where(col == lab_ref[...], logits, 0.0),
                            axis=-1, keepdims=True)

    @pl.when(j == pl.num_programs(1) - 1)
    def _fin():
        nll_ref[...] = m_sc[...] + jnp.log(s_sc[...]) - gold_sc[...]


def lmhead_with_loss(x2d, g, w, labels_col, tm=256, tn=512):
    N, K = x2d.shape
    V = w.shape[1]
    tm, tn = _tile(N, tm, 8), _tile(V, tn, 128)
    kern = functools.partial(_lmhead_loss_kernel, tn=tn)
    return pl.pallas_call(
        kern,
        out_shape=(jax.ShapeDtypeStruct((N, V), jnp.float32),
                   jax.ShapeDtypeStruct((N, 1), jnp.float32)),
        grid=(N // tm, V // tn),
        in_specs=[
            pl.BlockSpec((tm, K), lambda i, j: (i, 0)),
            pl.BlockSpec((1, K), lambda i, j: (0, 0)),
            pl.BlockSpec((K, tn), lambda i, j: (0, j)),
            pl.BlockSpec((tm, 1), lambda i, j: (i, 0)),
        ],
        out_specs=[
            pl.BlockSpec((tm, tn), lambda i, j: (i, j)),
            pl.BlockSpec((tm, 1), lambda i, j: (i, 0)),
        ],
        scratch_shapes=[pltpu.VMEM((tm, K), jnp.bfloat16),
                        pltpu.VMEM((tm, 1), jnp.float32),
                        pltpu.VMEM((tm, 1), jnp.float32),
                        pltpu.VMEM((tm, 1), jnp.float32)],
        compiler_params=pltpu.CompilerParams(
            dimension_semantics=("parallel", "arbitrary"),
            vmem_limit_bytes=VMEM_LIMIT),
    )(x2d, g.reshape(1, K), w, labels_col)


# ----------------------------------------------------------------------------- #
# Decoder (llama-style, single layer) built from the fused Pallas kernels
# ----------------------------------------------------------------------------- #
def _rope_tables(positions, dh):
    half = dh // 2
    inv_freq = 1.0 / (10000.0 ** (jnp.arange(0, half, dtype=jnp.float32) / half))
    ang = positions[:, None].astype(jnp.float32) * inv_freq[None, :]   # [L, half]
    cos, sin = jnp.cos(ang), jnp.sin(ang)
    return jnp.concatenate([cos, cos], -1), jnp.concatenate([sin, sin], -1)


def init_params(key, vocab, d_model, n_heads, d_ff):
    ks = jax.random.split(key, 9)
    s = 0.02

    def w(k, shape):
        return (jax.random.normal(k, shape, jnp.float32) * s).astype(jnp.bfloat16)

    wq = w(ks[1], (d_model, d_model))
    wk = w(ks[2], (d_model, d_model))
    wv = w(ks[3], (d_model, d_model))
    return {
        "embed": jax.random.normal(ks[0], (vocab, d_model), jnp.float32) * s,
        "g_attn": jnp.ones((d_model,), jnp.float32),
        "w_qkv": jnp.concatenate([wq, wk, wv], axis=1),    # [D, 3D] single MXU pass
        "w_kv_mem": jnp.concatenate([wk, wv], axis=1),     # [D, 2D] memory prefix
        "wo": w(ks[4], (d_model, d_model)),
        "g_mlp": jnp.ones((d_model,), jnp.float32),
        "wg": w(ks[5], (d_model, d_ff)),
        "wu": w(ks[6], (d_model, d_ff)),
        "wd": w(ks[7], (d_ff, d_model)),
        "g_final": jnp.ones((d_model,), jnp.float32),
        "lm_head": w(ks[8], (d_model, vocab)),
    }


def decoder_forward(params, input_ids, memory, labels, n_heads):
    """Mirrors Decoder.forward(input_ids, memory=memory, labels=labels)."""
    B, S = input_ids.shape
    V, D = params["embed"].shape
    H = n_heads
    dh = D // H
    M = 0 if memory is None else memory.shape[1]
    scale = 1.0 / (dh ** 0.5)

    # token embedding (glue)
    x = jnp.take(params["embed"], input_ids, axis=0)                     # [B,S,D] f32

    def heads(t):  # [B,L,D] bf16 -> [B,H,L,dh]  (layout plumbing)
        Bb, L, _ = t.shape
        return jnp.transpose(t.reshape(Bb, L, H, dh), (0, 2, 1, 3))

    # ---- self-attention block (memory prefix in the KV) ----
    qkv = rmsnorm_matmul(x, params["g_attn"], params["w_qkv"],
                         out_dtype=jnp.bfloat16)                          # [B,S,3D]
    q = heads(qkv[..., :D])
    k = heads(qkv[..., D:2 * D])
    v = heads(qkv[..., 2 * D:])

    if memory is not None:
        # TODO(synk): assumes memory is normalized with the same g_attn weights
        # before the k/v projection (reference Decoder not provided).
        kvm = rmsnorm_matmul(memory.astype(jnp.float32), params["g_attn"],
                             params["w_kv_mem"], out_dtype=jnp.bfloat16)  # [B,M,2D]
        k_all = jnp.concatenate([heads(kvm[..., :D]), k], axis=2)
        v_all = jnp.concatenate([heads(kvm[..., D:]), v], axis=2)
    else:
        k_all, v_all = k, v

    cos_q, sin_q = _rope_tables(jnp.arange(M, M + S), dh)
    cos_k, sin_k = _rope_tables(jnp.arange(M + S), dh)
    attn = flash_attention(q, k_all, v_all, cos_q * scale, sin_q * scale,
                           cos_k, sin_k, mem_len=M)                       # [B,H,S,dh]
    attn2d = jnp.transpose(attn, (0, 2, 1, 3)).reshape(B * S, D)

    x = matmul_residual(attn2d, params["wo"],
                        x.reshape(B * S, D)).reshape(B, S, D)             # + residual

    # ---- SwiGLU MLP block (norm + gate/up + SiLU*up fused) ----
    h = norm_swiglu(x, params["g_mlp"], params["wg"], params["wu"])       # [B,S,F]
    F = params["wg"].shape[1]
    x = matmul_residual(h.reshape(B * S, F), params["wd"],
                        x.reshape(B * S, D)).reshape(B, S, D)             # + residual

    # ---- LM head (+ fused cross-entropy when labels given) ----
    if labels is not None:
        nxt = jnp.concatenate(
            [labels[:, 1:], jnp.full((B, 1), -1, labels.dtype)], axis=1)  # shifted
        logits2d, nll = lmhead_with_loss(
            x.reshape(B * S, D), params["g_final"], params["lm_head"],
            nxt.reshape(B * S, 1).astype(jnp.int32))
        valid = (nxt.reshape(-1) >= 0).astype(jnp.float32)
        loss = jnp.sum(nll[:, 0] * valid) / jnp.maximum(jnp.sum(valid), 1.0)
        logits = logits2d.reshape(B, S, V)
    else:
        logits = rmsnorm_matmul(x, params["g_final"], params["lm_head"],
                                out_dtype=jnp.float32)
        loss = None

    return {"loss": loss, "logits": logits}


def model_forward(params, input_ids, memory=None, labels=None, clear_cache=None,
                  n_heads=4):
    """Model.forward: pure dispatch to the decoder forward."""
    outputs = decoder_forward(params, input_ids, memory, labels, n_heads)
    # TODO(synk): decoder.clear_kv_cache(clear_cache) is a stateful cache op with no
    # equivalent in this stateless forward; omitted.
    return outputs


# ----------------------------------------------------------------------------- #
if __name__ == "__main__":
    B, S, D, H, FF, V, M = 2, 8, 32, 4, 64, 64, 8   # chunk_size = S = 8

    key = jax.random.PRNGKey(0)
    kp, ki, km = jax.random.split(key, 3)

    params = init_params(kp, vocab=V, d_model=D, n_heads=H, d_ff=FF)
    input_ids = jax.random.randint(ki, (B, S), 0, V, dtype=jnp.int32)
    memory = jax.random.normal(km, (B, M, D), jnp.float32)   # encoder-produced memory
    labels = input_ids

    fwd = jax.jit(lambda p, ids, mem, lab: model_forward(p, ids, memory=mem,
                                                         labels=lab, n_heads=H))
    out = fwd(params, input_ids, memory, labels)
    jax.block_until_ready(out["logits"])
    jax.block_until_ready(out["loss"])

    assert out["logits"].shape == (B, S, V)
    assert bool(jnp.isfinite(out["loss"]))
    print("KERNEL_OK")
</pallas_src>

<mosaic_0001>
module attributes {stable_mosaic.version = 11 : i64} {
  func.func @_norm_mm_kernel(%arg0: i32, %arg1: i32, %arg2: memref<16x32xf32, #tpu.memory_space<vmem>>, %arg3: memref<1x32xf32, #tpu.memory_space<vmem>>, %arg4: memref<32x96xbf16, #tpu.memory_space<vmem>>, %arg5: memref<16x96xbf16, #tpu.memory_space<vmem>>) attributes {dimension_semantics = [#tpu.dimension_semantics<parallel>, #tpu.dimension_semantics<parallel>], iteration_bounds = array<i64: 1, 1>, scalar_prefetch = 0 : i64, scratch_operands = 0 : i64, tpu.core_type = #tpu.core_type<tc>, window_params = [{transform_indices = @transform_0, window_bounds = array<i64: 16, 32>}, {pipeline_mode = #tpu.pipeline_mode<synchronous>, transform_indices = @transform_1, window_bounds = array<i64: 1, 32>}, {transform_indices = @transform_2, window_bounds = array<i64: 32, 96>}, {transform_indices = @transform_3, window_bounds = array<i64: 16, 96>}]} {
    %c0 = arith.constant 0 : index
    %c0_0 = arith.constant 0 : index
    %0 = vector.load %arg2[%c0, %c0_0] : memref<16x32xf32, #tpu.memory_space<vmem>>, vector<16x32xf32>
    %1 = arith.mulf %0, %0 : vector<16x32xf32>
    %cst = arith.constant dense<0.000000e+00> : vector<16xf32>
    %2 = vector.multi_reduction <add>, %1, %cst [1] : vector<16x32xf32> to vector<16xf32>
    %3 = vector.shape_cast %2 : vector<16xf32> to vector<16x1xf32>
    %cst_1 = arith.constant 3.200000e+01 : f32
    %4 = vector.broadcast %cst_1 : f32 to vector<16x1xf32>
    %5 = arith.divf %3, %4 : vector<16x1xf32>
    %cst_2 = arith.constant 9.99999997E-7 : f32
    %6 = vector.broadcast %cst_2 : f32 to vector<16x1xf32>
    %7 = arith.addf %5, %6 : vector<16x1xf32>
    %8 = math.rsqrt %7 : vector<16x1xf32>
    %9 = vector.broadcast %8 : vector<16x1xf32> to vector<16x32xf32>
    %10 = arith.mulf %0, %9 : vector<16x32xf32>
    %c0_3 = arith.constant 0 : index
    %c0_4 = arith.constant 0 : index
    %11 = vector.load %arg3[%c0_3, %c0_4] : memref<1x32xf32, #tpu.memory_space<vmem>>, vector<1x32xf32>
    %12 = vector.broadcast %11 : vector<1x32xf32> to vector<16x32xf32>
    %13 = arith.mulf %10, %12 : vector<16x32xf32>
    %14 = arith.truncf %13 : vector<16x32xf32> to vector<16x32xbf16>
    %c0_5 = arith.constant 0 : index
    %c0_6 = arith.constant 0 : index
    %15 = vector.load %arg4[%c0_5, %c0_6] : memref<32x96xbf16, #tpu.memory_space<vmem>>, vector<32x96xbf16>
    %cst_7 = arith.constant dense<0.000000e+00> : vector<16x96xf32>
    %16 = tpu.matmul %14, %15, %cst_7 {dimension_numbers = #tpu.dot_dimension_numbers<[1], [0], [0], [1], [0, 0, 1, 1], [], []>} : vector<16x32xbf16>, vector<32x96xbf16>, vector<16x96xf32> -> vector<16x96xf32>
    %17 = arith.truncf %16 : vector<16x96xf32> to vector<16x96xbf16>
    %c0_8 = arith.constant 0 : index
    %c0_9 = arith.constant 0 : index
    %18 = vector.load %arg5[%c0_8, %c0_9] : memref<16x96xbf16, #tpu.memory_space<vmem>>, vector<16x96xbf16>
    tpu.vector_store %arg5[%c0_8, %c0_9], %17 {strides = array<i32>} : memref<16x96xbf16, #tpu.memory_space<vmem>>, vector<16x96xbf16>,
    return
  }
  func.func @transform_0(%arg0: i32, %arg1: i32) -> (i32, i32) {
    %c0_i32 = arith.constant 0 : i32
    %c0_i32_0 = arith.constant 0 : i32
    return %arg0, %c0_i32 : i32, i32
  }
  func.func @transform_1(%arg0: i32, %arg1: i32) -> (i32, i32) {
    %c0_i32 = arith.constant 0 : i32
    %c0_i32_0 = arith.constant 0 : i32
    %c0_i32_1 = arith.constant 0 : i32
    return %c0_i32, %c0_i32_0 : i32, i32
  }
  func.func @transform_2(%arg0: i32, %arg1: i32) -> (i32, i32) {
    %c0_i32 = arith.constant 0 : i32
    %c0_i32_0 = arith.constant 0 : i32
    return %c0_i32, %arg1 : i32, i32
  }
  func.func @transform_3(%arg0: i32, %arg1: i32) -> (i32, i32) {
    %c0_i32 = arith.constant 0 : i32
    return %arg0, %arg1 : i32, i32
  }
}

module attributes {stable_mosaic.version = 11 : i64} {
  func.func @_norm_mm_kernel(%arg0: i32, %arg1: i32, %arg2: memref<16x32xf32, #tpu.memory_space<vmem>>, %arg3: memref<1x32xf32, #tpu.memory_space<vmem>>, %arg4: memref<32x64xbf16, #tpu.memory_space<vmem>>, %arg5: memref<16x64xbf16, #tpu.memory_space<vmem>>) attributes {dimension_semantics = [#tpu.dimension_semantics<parallel>, #tpu.dimension_semantics<parallel>], iteration_bounds = array<i64: 1, 1>, scalar_prefetch = 0 : i64, scratch_operands = 0 : i64, tpu.core_type = #tpu.core_type<tc>, window_params = [{transform_indices = @transform_0, window_bounds = array<i64: 16, 32>}, {pipeline_mode = #tpu.pipeline_mode<synchronous>, transform_indices = @transform_1, window_bounds = array<i64: 1, 32>}, {transform_indices = @transform_2, window_bounds = array<i64: 32, 64>}, {transform_indices = @transform_3, window_bounds = array<i64: 16, 64>}]} {
    %c0 = arith.constant 0 : index
    %c0_0 = arith.constant 0 : index
    %0 = vector.load %arg2[%c0, %c0_0] : memref<16x32xf32, #tpu.memory_space<vmem>>, vector<16x32xf32>
    %1 = arith.mulf %0, %0 : vector<16x32xf32>
    %cst = arith.constant dense<0.000000e+00> : vector<16xf32>
    %2 = vector.multi_reduction <add>, %1, %cst [1] : vector<16x32xf32> to vector<16xf32>
    %3 = vector.shape_cast %2 : vector<16xf32> to vector<16x1xf32>
    %cst_1 = arith.constant 3.200000e+01 : f32
    %4 = vector.broadcast %cst_1 : f32 to vector<16x1xf32>
    %5 = arith.divf %3, %4 : vector<16x1xf32>
    %cst_2 = arith.constant 9.99999997E-7 : f32
    %6 = vector.broadcast %cst_2 : f32 to vector<16x1xf32>
    %7 = arith.addf %5, %6 : vector<16x1xf32>
    %8 = math.rsqrt %7 : vector<16x1xf32>
    %9 = vector.broadcast %8 : vector<16x1xf32> to vector<16x32xf32>
    %10 = arith.mulf %0, %9 : vector<16x32xf32>
    %c0_3 = arith.constant 0 : index
    %c0_4 = arith.constant 0 : index
    %11 = vector.load %arg3[%c0_3, %c0_4] : memref<1x32xf32, #tpu.memory_space<vmem>>, vector<1x32xf32>
    %12 = vector.broadcast %11 : vector<1x32xf32> to vector<16x32xf32>
    %13 = arith.mulf %10, %12 : vector<16x32xf32>
    %14 = arith.truncf %13 : vector<16x32xf32> to vector<16x32xbf16>
    %c0_5 = arith.constant 0 : index
    %c0_6 = arith.constant 0 : index
    %15 = vector.load %arg4[%c0_5, %c0_6] : memref<32x64xbf16, #tpu.memory_space<vmem>>, vector<32x64xbf16>
    %cst_7 = arith.constant dense<0.000000e+00> : vector<16x64xf32>
    %16 = tpu.matmul %14, %15, %cst_7 {dimension_numbers = #tpu.dot_dimension_numbers<[1], [0], [0], [1], [0, 0, 1, 1], [], []>} : vector<16x32xbf16>, vector<32x64xbf16>, vector<16x64xf32> -> vector<16x64xf32>
    %17 = arith.truncf %16 : vector<16x64xf32> to vector<16x64xbf16>
    %c0_8 = arith.constant 0 : index
    %c0_9 = arith.constant 0 : index
    %18 = vector.load %arg5[%c0_8, %c0_9] : memref<16x64xbf16, #tpu.memory_space<vmem>>, vector<16x64xbf16>
    tpu.vector_store %arg5[%c0_8, %c0_9], %17 {strides = array<i32>} : memref<16x64xbf16, #tpu.memory_space<vmem>>, vector<16x64xbf16>,
    return
  }
  func.func @transform_0(%arg0: i32, %arg1: i32) -> (i32, i32) {
    %c0_i32 = arith.constant 0 : i32
    %c0_i32_0 = arith.constant 0 : i32
    return %arg0, %c0_i32 : i32, i32
  }
  func.func @transform_1(%arg0: i32, %arg1: i32) -> (i32, i32) {
    %c0_i32 = arith.constant 0 : i32
    %c0_i32_0 = arith.constant 0 : i32
    %c0_i32_1 = arith.constant 0 : i32
    return %c0_i32, %c0_i32_0 : i32, i32
  }
  func.func @transform_2(%arg0: i32, %arg1: i32) -> (i32, i32) {
    %c0_i32 = arith.constant 0 : i32
    %c0_i32_0 = arith.constant 0 : i32
    return %c0_i32, %arg1 : i32, i32
  }
  func.func @transform_3(%arg0: i32, %arg1: i32) -> (i32, i32) {
    %c0_i32 = arith.constant 0 : i32
    return %arg0, %arg1 : i32, i32
  }
}

module attributes {stable_mosaic.version = 11 : i64} {
  func.func @_flash_kernel(%arg0: i32, %arg1: i32, %arg2: i32, %arg3: i32, %arg4: memref<1x1x8x8xbf16, #tpu.memory_space<vmem>>, %arg5: memref<1x1x16x8xbf16, #tpu.memory_space<vmem>>, %arg6: memref<1x1x16x8xbf16, #tpu.memory_space<vmem>>, %arg7: memref<8x8xf32, #tpu.memory_space<vmem>>, %arg8: memref<8x8xf32, #tpu.memory_space<vmem>>, %arg9: memref<16x8xf32, #tpu.memory_space<vmem>>, %arg10: memref<16x8xf32, #tpu.memory_space<vmem>>, %arg11: memref<1x1x8x8xbf16, #tpu.memory_space<vmem>>, %arg12: memref<8x1xf32, #tpu.memory_space<vmem>>, %arg13: memref<8x1xf32, #tpu.memory_space<vmem>>, %arg14: memref<8x8xf32, #tpu.memory_space<vmem>>) attributes {dimension_semantics = [#tpu.dimension_semantics<parallel>, #tpu.dimension_semantics<parallel>, #tpu.dimension_semantics<parallel>, #tpu.dimension_semantics<arbitrary>], iteration_bounds = array<i64: 2, 4, 1, 1>, scalar_prefetch = 0 : i64, scratch_operands = 3 : i64, tpu.core_type = #tpu.core_type<tc>, window_params = [{transform_indices = @transform_0, window_bounds = array<i64: 1, 1, 8, 8>}, {transform_indices = @transform_1, window_bounds = array<i64: 1, 1, 16, 8>}, {transform_indices = @transform_2, window_bounds = array<i64: 1, 1, 16, 8>}, {transform_indices = @transform_3, window_bounds = array<i64: 8, 8>}, {transform_indices = @transform_4, window_bounds = array<i64: 8, 8>}, {transform_indices = @transform_5, window_bounds = array<i64: 16, 8>}, {transform_indices = @transform_6, window_bounds = array<i64: 16, 8>}, {transform_indices = @transform_7, window_bounds = array<i64: 1, 1, 8, 8>}]} {
    %c0_i32 = arith.constant 0 : i32
    %0 = arith.cmpi eq, %arg3, %c0_i32 : i32
    %1 = arith.extui %0 : i1 to i32
    %c0_i32_0 = arith.constant 0 : i32
    %2 = arith.cmpi ne, %1, %c0_i32_0 : i32
    scf.if %2 {
      %cst_41 = arith.constant -1.000000e+30 : f32
      %72 = vector.broadcast %cst_41 : f32 to vector<8x1xf32>
      %c0_42 = arith.constant 0 : index
      %c0_43 = arith.constant 0 : index
      %73 = vector.load %arg12[%c0_42, %c0_43] : memref<8x1xf32, #tpu.memory_space<vmem>>, vector<8x1xf32>
      tpu.vector_store %arg12[%c0_42, %c0_43], %72 {strides = array<i32>} : memref<8x1xf32, #tpu.memory_space<vmem>>, vector<8x1xf32>,
      %cst_44 = arith.constant 0.000000e+00 : f32
      %74 = vector.broadcast %cst_44 : f32 to vector<8x1xf32>
      %c0_45 = arith.constant 0 : index
      %c0_46 = arith.constant 0 : index
      %75 = vector.load %arg13[%c0_45, %c0_46] : memref<8x1xf32, #tpu.memory_space<vmem>>, vector<8x1xf32>
      tpu.vector_store %arg13[%c0_45, %c0_46], %74 {strides = array<i32>} : memref<8x1xf32, #tpu.memory_space<vmem>>, vector<8x1xf32>,
      %cst_47 = arith.constant 0.000000e+00 : f32
      %76 = vector.broadcast %cst_47 : f32 to vector<8x8xf32>
      %c0_48 = arith.constant 0 : index
      %c0_49 = arith.constant 0 : index
      %77 = vector.load %arg14[%c0_48, %c0_49] : memref<8x8xf32, #tpu.memory_space<vmem>>, vector<8x8xf32>
      tpu.vector_store %arg14[%c0_48, %c0_49], %76 {strides = array<i32>} : memref<8x8xf32, #tpu.memory_space<vmem>>, vector<8x8xf32>,
    } else {
    }
    %c0 = arith.constant 0 : index
    %c0_1 = arith.constant 0 : index
    %c0_2 = arith.constant 0 : index
    %c0_3 = arith.constant 0 : index
    %3 = vector.load %arg4[%c0, %c0_1, %c0_2, %c0_3] : memref<1x1x8x8xbf16, #tpu.memory_space<vmem>>, vector<1x1x8x8xbf16>
    %4 = vector.shape_cast %3 : vector<1x1x8x8xbf16> to vector<8x8xbf16>
    %5 = arith.extf %4 : vector<8x8xbf16> to vector<8x8xf32>
    %c0_4 = arith.constant 0 : index
    %c0_5 = arith.constant 0 : index
    %6 = vector.load %arg7[%c0_4, %c0_5] : memref<8x8xf32, #tpu.memory_space<vmem>>, vector<8x8xf32>
    %c0_6 = arith.constant 0 : index
    %c0_7 = arith.constant 0 : index
    %7 = vector.load %arg8[%c0_6, %c0_7] : memref<8x8xf32, #tpu.memory_space<vmem>>, vector<8x8xf32>
    %8 = vector.extract_strided_slice %5 {offsets = [0, 4], sizes = [8, 4], strides = [1, 1]} : vector<8x8xf32> to vector<8x4xf32>
    %cst = arith.constant 0.000000e+00 : f32
    %9 = vector.broadcast %cst : f32 to vector<8x4xf32>
    %10 = arith.subf %9, %8 : vector<8x4xf32>
    %11 = vector.extract_strided_slice %5 {offsets = [0, 0], sizes = [8, 4], strides = [1, 1]} : vector<8x8xf32> to vector<8x4xf32>
    %12 = tpu.concatenate %10, %11 in 1 : vector<8x4xf32>, vector<8x4xf32> -> vector<8x8xf32>
    %13 = arith.mulf %5, %6 : vector<8x8xf32>
    %14 = arith.mulf %12, %7 : vector<8x8xf32>
    %15 = arith.addf %13, %14 : vector<8x8xf32>
    %16 = arith.truncf %15 : vector<8x8xf32> to vector<8x8xbf16>
    %c0_8 = arith.constant 0 : index
    %c0_9 = arith.constant 0 : index
    %c0_10 = arith.constant 0 : index
    %c0_11 = arith.constant 0 : index
    %17 = vector.load %arg5[%c0_8, %c0_9, %c0_10, %c0_11] : memref<1x1x16x8xbf16, #tpu.memory_space<vmem>>, vector<1x1x16x8xbf16>
    %18 = vector.shape_cast %17 : vector<1x1x16x8xbf16> to vector<16x8xbf16>
    %19 = arith.extf %18 : vector<16x8xbf16> to vector<16x8xf32>
    %c0_12 = arith.constant 0 : index
    %c0_13 = arith.constant 0 : index
    %20 = vector.load %arg9[%c0_12, %c0_13] : memref<16x8xf32, #tpu.memory_space<vmem>>, vector<16x8xf32>
    %c0_14 = arith.constant 0 : index
    %c0_15 = arith.constant 0 : index
    %21 = vector.load %arg10[%c0_14, %c0_15] : memref<16x8xf32, #tpu.memory_space<vmem>>, vector<16x8xf32>
    %22 = vector.extract_strided_slice %19 {offsets = [0, 4], sizes = [16, 4], strides = [1, 1]} : vector<16x8xf32> to vector<16x4xf32>
    %cst_16 = arith.constant 0.000000e+00 : f32
    %23 = vector.broadcast %cst_16 : f32 to vector<16x4xf32>
    %24 = arith.subf %23, %22 : vector<16x4xf32>
    %25 = vector.extract_strided_slice %19 {offsets = [0, 0], sizes = [16, 4], strides = [1, 1]} : vector<16x8xf32> to vector<16x4xf32>
    %26 = tpu.concatenate %24, %25 in 1 : vector<16x4xf32>, vector<16x4xf32> -> vector<16x8xf32>
    %27 = arith.mulf %19, %20 : vector<16x8xf32>
    %28 = arith.mulf %26, %21 : vector<16x8xf32>
    %29 = arith.addf %27, %28 : vector<16x8xf32>
    %30 = arith.truncf %29 : vector<16x8xf32> to vector<16x8xbf16>
    %c0_17 = arith.constant 0 : index
    %c0_18 = arith.constant 0 : index
    %c0_19 = arith.constant 0 : index
    %c0_20 = arith.constant 0 : index
    %31 = vector.load %arg6[%c0_17, %c0_18, %c0_19, %c0_20] : memref<1x1x16x8xbf16, #tpu.memory_space<vmem>>, vector<1x1x16x8xbf16>
    %32 = vector.shape_cast %31 : vector<1x1x16x8xbf16> to vector<16x8xbf16>
    %cst_21 = arith.constant dense<0.000000e+00> : vector<8x16xf32>
    %33 = tpu.matmul %16, %30, %cst_21 {dimension_numbers = #tpu.dot_dimension_numbers<[1], [1], [0], [0], [0, 0, 1, 0], [], []>} : vector<8x8xbf16>, vector<16x8xbf16>, vector<8x16xf32> -> vector<8x16xf32>
    %c8_i32 = arith.constant 8 : i32
    %34 = arith.muli %arg2, %c8_i32 : i32
    %c8_i32_22 = arith.constant 8 : i32
    %35 = arith.addi %c8_i32_22, %34 : i32
    %36 = tpu.iota {dimensions = array<i32: 0>} : vector<8x16xi32>
    %37 = vector.broadcast %35 : i32 to vector<8x16xi32>
    %38 = arith.addi %37, %36 : vector<8x16xi32>
    %c16_i32 = arith.constant 16 : i32
    %39 = arith.muli %arg3, %c16_i32 : i32
    %40 = tpu.iota {dimensions = array<i32: 1>} : vector<8x16xi32>
    %41 = vector.broadcast %39 : i32 to vector<8x16xi32>
    %42 = arith.addi %41, %40 : vector<8x16xi32>
    %43 = arith.cmpi sle, %42, %38 : vector<8x16xi32>
    %cst_23 = arith.constant -1.000000e+30 : f32
    %44 = vector.broadcast %cst_23 : f32 to vector<8x16xf32>
    %45 = arith.select %43, %33, %44 : vector<8x16xi1>, vector<8x16xf32>
    %c0_24 = arith.constant 0 : index
    %c0_25 = arith.constant 0 : index
    %46 = vector.load %arg12[%c0_24, %c0_25] : memref<8x1xf32, #tpu.memory_space<vmem>>, vector<8x1xf32>
    %cst_26 = arith.constant dense<0xFF800000> : vector<8xf32>
    %47 = vector.multi_reduction <maximumf>, %45, %cst_26 [1] : vector<8x16xf32> to vector<8xf32>
    %48 = vector.shape_cast %47 : vector<8xf32> to vector<8x1xf32>
    %49 = arith.maximumf %46, %48 : vector<8x1xf32>
    %50 = arith.subf %46, %49 : vector<8x1xf32>
    %51 = math.exp %50 : vector<8x1xf32>
    %52 = vector.broadcast %49 : vector<8x1xf32> to vector<8x16xf32>
    %53 = arith.subf %45, %52 : vector<8x16xf32>
    %54 = math.exp %53 : vector<8x16xf32>
    %c0_27 = arith.constant 0 : index
    %c0_28 = arith.constant 0 : index
    %55 = vector.load %arg13[%c0_27, %c0_28] : memref<8x1xf32, #tpu.memory_space<vmem>>, vector<8x1xf32>
    %56 = arith.mulf %51, %55 : vector<8x1xf32>
    %cst_29 = arith.constant dense<0.000000e+00> : vector<8xf32>
    %57 = vector.multi_reduction <add>, %54, %cst_29 [1] : vector<8x16xf32> to vector<8xf32>
    %58 = vector.shape_cast %57 : vector<8xf32> to vector<8x1xf32>
    %59 = arith.addf %56, %58 : vector<8x1xf32>
    %c0_30 = arith.constant 0 : index
    %c0_31 = arith.constant 0 : index
    %60 = vector.load %arg13[%c0_30, %c0_31] : memref<8x1xf32, #tpu.memory_space<vmem>>, vector<8x1xf32>
    tpu.vector_store %arg13[%c0_30, %c0_31], %59 {strides = array<i32>} : memref<8x1xf32, #tpu.memory_space<vmem>>, vector<8x1xf32>,
    %c0_32 = arith.constant 0 : index
    %c0_33 = arith.constant 0 : index
    %61 = vector.load %arg14[%c0_32, %c0_33] : memref<8x8xf32, #tpu.memory_space<vmem>>, vector<8x8xf32>
    %62 = vector.broadcast %51 : vector<8x1xf32> to vector<8x8xf32>
    %63 = arith.mulf %62, %61 : vector<8x8xf32>
    %64 = arith.truncf %54 : vector<8x16xf32> to vector<8x16xbf16>
    %cst_34 = arith.constant dense<0.000000e+00> : vector<8x8xf32>
    %65 = tpu.matmul %64, %32, %cst_34 {dimension_numbers = #tpu.dot_dimension_numbers<[1], [0], [0], [1], [0, 0, 1, 1], [], []>} : vector<8x16xbf16>, vector<16x8xbf16>, vector<8x8xf32> -> vector<8x8xf32>
    %66 = arith.addf %63, %65 : vector<8x8xf32>
    %c0_35 = arith.constant 0 : index
    %c0_36 = arith.constant 0 : index
    %67 = vector.load %arg14[%c0_35, %c0_36] : memref<8x8xf32, #tpu.memory_space<vmem>>, vector<8x8xf32>
    tpu.vector_store %arg14[%c0_35, %c0_36], %66 {strides = array<i32>} : memref<8x8xf32, #tpu.memory_space<vmem>>, vector<8x8xf32>,
    %c0_37 = arith.constant 0 : index
    %c0_38 = arith.constant 0 : index
    %68 = vector.load %arg12[%c0_37, %c0_38] : memref<8x1xf32, #tpu.memory_space<vmem>>, vector<8x1xf32>
    tpu.vector_store %arg12[%c0_37, %c0_38], %49 {strides = array<i32>} : memref<8x1xf32, #tpu.memory_space<vmem>>, vector<8x1xf32>,
    %c0_i32_39 = arith.constant 0 : i32
    %69 = arith.cmpi eq, %arg3, %c0_i32_39 : i32
    %70 = arith.extui %69 : i1 to i32
    %c0_i32_40 = arith.constant 0 : i32
    %71 = arith.cmpi ne, %70, %c0_i32_40 : i32
    scf.if %71 {
      %c0_41 = arith.constant 0 : index
      %c0_42 = arith.constant 0 : index
      %72 = vector.load %arg14[%c0_41, %c0_42] : memref<8x8xf32, #tpu.memory_space<vmem>>, vector<8x8xf32>
      %c0_43 = arith.constant 0 : index
      %c0_44 = arith.constant 0 : index
      %73 = vector.load %arg13[%c0_43, %c0_44] : memref<8x1xf32, #tpu.memory_space<vmem>>, vector<8x1xf32>
      %74 = tpu.reciprocal %73 {approx = true} : vector<8x1xf32> -> vector<8x1xf32>
      %75 = vector.broadcast %74 : vector<8x1xf32> to vector<8x8xf32>
      %76 = arith.mulf %72, %75 : vector<8x8xf32>
      %77 = arith.truncf %76 : vector<8x8xf32> to vector<8x8xbf16>
      %c0_45 = arith.constant 0 : index
      %c0_46 = arith.constant 0 : index
      %c0_47 = arith.constant 0 : index
      %c0_48 = arith.constant 0 : index
      %78 = vector.load %arg11[%c0_45, %c0_46, %c0_47, %c0_48] : memref<1x1x8x8xbf16, #tpu.memory_space<vmem>>, vector<1x1x8x8xbf16>
      %79 = vector.shape_cast %78 : vector<1x1x8x8xbf16> to vector<8x8xbf16>
      %80 = vector.shape_cast %77 : vector<8x8xbf16> to vector<1x1x8x8xbf16>
      tpu.vector_store %arg11[%c0_45, %c0_46, %c0_47, %c0_48], %80 {strides = array<i32>} : memref<1x1x8x8xbf16, #tpu.memory_space<vmem>>, vector<1x1x8x8xbf16>,
    } else {
    }
    return
  }
  func.func @transform_0(%arg0: i32, %arg1: i32, %arg2: i32, %arg3: i32) -> (i32, i32, i32, i32) {
    %c0_i32 = arith.constant 0 : i32
    %c0_i32_0 = arith.constant 0 : i32
    return %arg0, %arg1, %arg2, %c0_i32 : i32, i32, i32, i32
  }
  func.func @transform_1(%arg0: i32, %arg1: i32, %arg2: i32, %arg3: i32) -> (i32, i32, i32, i32) {
    %c0_i32 = arith.constant 0 : i32
    %c0_i32_0 = arith.constant 0 : i32
    return %arg0, %arg1, %arg3, %c0_i32 : i32, i32, i32, i32
  }
  func.func @transform_2(%arg0: i32, %arg1: i32, %arg2: i32, %arg3: i32) -> (i32, i32, i32, i32) {
    %c0_i32 = arith.constant 0 : i32
    %c0_i32_0 = arith.constant 0 : i32
    return %arg0, %arg1, %arg3, %c0_i32 : i32, i32, i32, i32
  }
  func.func @transform_3(%arg0: i32, %arg1: i32, %arg2: i32, %arg3: i32) -> (i32, i32) {
    %c0_i32 = arith.constant 0 : i32
    %c0_i32_0 = arith.constant 0 : i32
    return %arg2, %c0_i32 : i32, i32
  }
  func.func @transform_4(%arg0: i32, %arg1: i32, %arg2: i32, %arg3: i32) -> (i32, i32) {
    %c0_i32 = arith.constant 0 : i32
    %c0_i32_0 = arith.constant 0 : i32
    return %arg2, %c0_i32 : i32, i32
  }
  func.func @transform_5(%arg0: i32, %arg1: i32, %arg2: i32, %arg3: i32) -> (i32, i32) {
    %c0_i32 = arith.constant 0 : i32
    %c0_i32_0 = arith.constant 0 : i32
    return %arg3, %c0_i32 : i32, i32
  }
  func.func @transform_6(%arg0: i32, %arg1: i32, %arg2: i32, %arg3: i32) -> (i32, i32) {
    %c0_i32 = arith.constant 0 : i32
    %c0_i32_0 = arith.constant 0 : i32
    return %arg3, %c0_i32 : i32, i32
  }
  func.func @transform_7(%arg0: i32, %arg1: i32, %arg2: i32, %arg3: i32) -> (i32, i32, i32, i32) {
    %c0_i32 = arith.constant 0 : i32
    %c0_i32_0 = arith.constant 0 : i32
    return %arg0, %arg1, %arg2, %c0_i32 : i32, i32, i32, i32
  }
}

module attributes {stable_mosaic.version = 11 : i64} {
  func.func @_mm_res_kernel(%arg0: i32, %arg1: i32, %arg2: i32, %arg3: memref<16x32xbf16, #tpu.memory_space<vmem>>, %arg4: memref<32x32xbf16, #tpu.memory_space<vmem>>, %arg5: memref<16x32xf32, #tpu.memory_space<vmem>>, %arg6: memref<16x32xf32, #tpu.memory_space<vmem>>, %arg7: memref<16x32xf32, #tpu.memory_space<vmem>>) attributes {dimension_semantics = [#tpu.dimension_semantics<parallel>, #tpu.dimension_semantics<parallel>, #tpu.dimension_semantics<arbitrary>], iteration_bounds = array<i64: 1, 1, 1>, scalar_prefetch = 0 : i64, scratch_operands = 1 : i64, tpu.core_type = #tpu.core_type<tc>, window_params = [{transform_indices = @transform_0, window_bounds = array<i64: 16, 32>}, {transform_indices = @transform_1, window_bounds = array<i64: 32, 32>}, {transform_indices = @transform_2, window_bounds = array<i64: 16, 32>}, {transform_indices = @transform_3, window_bounds = array<i64: 16, 32>}]} {
    %c0_i32 = arith.constant 0 : i32
    %0 = arith.cmpi eq, %arg2, %c0_i32 : i32
    %1 = arith.extui %0 : i1 to i32
    %c0_i32_0 = arith.constant 0 : i32
    %2 = arith.cmpi ne, %1, %c0_i32_0 : i32
    scf.if %2 {
      %cst_10 = arith.constant 0.000000e+00 : f32
      %12 = vector.broadcast %cst_10 : f32 to vector<16x32xf32>
      %c0_11 = arith.constant 0 : index
      %c0_12 = arith.constant 0 : index
      %13 = vector.load %arg7[%c0_11, %c0_12] : memref<16x32xf32, #tpu.memory_space<vmem>>, vector<16x32xf32>
      tpu.vector_store %arg7[%c0_11, %c0_12], %12 {strides = array<i32>} : memref<16x32xf32, #tpu.memory_space<vmem>>, vector<16x32xf32>,
    } else {
    }
    %c0 = arith.constant 0 : index
    %c0_1 = arith.constant 0 : index
    %3 = vector.load %arg7[%c0, %c0_1] : memref<16x32xf32, #tpu.memory_space<vmem>>, vector<16x32xf32>
    %c0_2 = arith.constant 0 : index
    %c0_3 = arith.constant 0 : index
    %4 = vector.load %arg3[%c0_2, %c0_3] : memref<16x32xbf16, #tpu.memory_space<vmem>>, vector<16x32xbf16>
    %c0_4 = arith.constant 0 : index
    %c0_5 = arith.constant 0 : index
    %5 = vector.load %arg4[%c0_4, %c0_5] : memref<32x32xbf16, #tpu.memory_space<vmem>>, vector<32x32xbf16>
    %cst = arith.constant dense<0.000000e+00> : vector<16x32xf32>
    %6 = tpu.matmul %4, %5, %cst {dimension_numbers = #tpu.dot_dimension_numbers<[1], [0], [0], [1], [0, 0, 1, 1], [], []>} : vector<16x32xbf16>, vector<32x32xbf16>, vector<16x32xf32> -> vector<16x32xf32>
    %7 = arith.addf %3, %6 : vector<16x32xf32>
    %c0_6 = arith.constant 0 : index
    %c0_7 = arith.constant 0 : index
    %8 = vector.load %arg7[%c0_6, %c0_7] : memref<16x32xf32, #tpu.memory_space<vmem>>, vector<16x32xf32>
    tpu.vector_store %arg7[%c0_6, %c0_7], %7 {strides = array<i32>} : memref<16x32xf32, #tpu.memory_space<vmem>>, vector<16x32xf32>,
    %c0_i32_8 = arith.constant 0 : i32
    %9 = arith.cmpi eq, %arg2, %c0_i32_8 : i32
    %10 = arith.extui %9 : i1 to i32
    %c0_i32_9 = arith.constant 0 : i32
    %11 = arith.cmpi ne, %10, %c0_i32_9 : i32
    scf.if %11 {
      %c0_10 = arith.constant 0 : index
      %c0_11 = arith.constant 0 : index
      %12 = vector.load %arg7[%c0_10, %c0_11] : memref<16x32xf32, #tpu.memory_space<vmem>>, vector<16x32xf32>
      %c0_12 = arith.constant 0 : index
      %c0_13 = arith.constant 0 : index
      %13 = vector.load %arg5[%c0_12, %c0_13] : memref<16x32xf32, #tpu.memory_space<vmem>>, vector<16x32xf32>
      %14 = arith.addf %12, %13 : vector<16x32xf32>
      %c0_14 = arith.constant 0 : index
      %c0_15 = arith.constant 0 : index
      %15 = vector.load %arg6[%c0_14, %c0_15] : memref<16x32xf32, #tpu.memory_space<vmem>>, vector<16x32xf32>
      tpu.vector_store %arg6[%c0_14, %c0_15], %14 {strides = array<i32>} : memref<16x32xf32, #tpu.memory_space<vmem>>, vector<16x32xf32>,
    } else {
    }
    return
  }
  func.func @transform_0(%arg0: i32, %arg1: i32, %arg2: i32) -> (i32, i32) {
    %c0_i32 = arith.constant 0 : i32
    return %arg0, %arg2 : i32, i32
  }
  func.func @transform_1(%arg0: i32, %arg1: i32, %arg2: i32) -> (i32, i32) {
    %c0_i32 = arith.constant 0 : i32
    return %arg2, %arg1 : i32, i32
  }
  func.func @transform_2(%arg0: i32, %arg1: i32, %arg2: i32) -> (i32, i32) {
    %c0_i32 = arith.constant 0 : i32
    return %arg0, %arg1 : i32, i32
  }
  func.func @transform_3(%arg0: i32, %arg1: i32, %arg2: i32) -> (i32, i32) {
    %c0_i32 = arith.constant 0 : i32
    return %arg0, %arg1 : i32, i32
  }
}

module attributes {stable_mosaic.version = 11 : i64} {
  func.func @_mm_res_kernel(%arg0: i32, %arg1: i32, %arg2: i32, %arg3: memref<16x64xbf16, #tpu.memory_space<vmem>>, %arg4: memref<64x32xbf16, #tpu.memory_space<vmem>>, %arg5: memref<16x32xf32, #tpu.memory_space<vmem>>, %arg6: memref<16x32xf32, #tpu.memory_space<vmem>>, %arg7: memref<16x32xf32, #tpu.memory_space<vmem>>) attributes {dimension_semantics = [#tpu.dimension_semantics<parallel>, #tpu.dimension_semantics<parallel>, #tpu.dimension_semantics<arbitrary>], iteration_bounds = array<i64: 1, 1, 1>, scalar_prefetch = 0 : i64, scratch_operands = 1 : i64, tpu.core_type = #tpu.core_type<tc>, window_params = [{transform_indices = @transform_0, window_bounds = array<i64: 16, 64>}, {transform_indices = @transform_1, window_bounds = array<i64: 64, 32>}, {transform_indices = @transform_2, window_bounds = array<i64: 16, 32>}, {transform_indices = @transform_3, window_bounds = array<i64: 16, 32>}]} {
    %c0_i32 = arith.constant 0 : i32
    %0 = arith.cmpi eq, %arg2, %c0_i32 : i32
    %1 = arith.extui %0 : i1 to i32
    %c0_i32_0 = arith.constant 0 : i32
    %2 = arith.cmpi ne, %1, %c0_i32_0 : i32
    scf.if %2 {
      %cst_10 = arith.constant 0.000000e+00 : f32
      %12 = vector.broadcast %cst_10 : f32 to vector<16x32xf32>
      %c0_11 = arith.constant 0 : index
      %c0_12 = arith.constant 0 : index
      %13 = vector.load %arg7[%c0_11, %c0_12] : memref<16x32xf32, #tpu.memory_space<vmem>>, vector<16x32xf32>
      tpu.vector_store %arg7[%c0_11, %c0_12], %12 {strides = array<i32>} : memref<16x32xf32, #tpu.memory_space<vmem>>, vector<16x32xf32>,
    } else {
    }
    %c0 = arith.constant 0 : index
    %c0_1 = arith.constant 0 : index
    %3 = vector.load %arg7[%c0, %c0_1] : memref<16x32xf32, #tpu.memory_space<vmem>>, vector<16x32xf32>
    %c0_2 = arith.constant 0 : index
    %c0_3 = arith.constant 0 : index
    %4 = vector.load %arg3[%c0_2, %c0_3] : memref<16x64xbf16, #tpu.memory_space<vmem>>, vector<16x64xbf16>
    %c0_4 = arith.constant 0 : index
    %c0_5 = arith.constant 0 : index
    %5 = vector.load %arg4[%c0_4, %c0_5] : memref<64x32xbf16, #tpu.memory_space<vmem>>, vector<64x32xbf16>
    %cst = arith.constant dense<0.000000e+00> : vector<16x32xf32>
    %6 = tpu.matmul %4, %5, %cst {dimension_numbers = #tpu.dot_dimension_numbers<[1], [0], [0], [1], [0, 0, 1, 1], [], []>} : vector<16x64xbf16>, vector<64x32xbf16>, vector<16x32xf32> -> vector<16x32xf32>
    %7 = arith.addf %3, %6 : vector<16x32xf32>
    %c0_6 = arith.constant 0 : index
    %c0_7 = arith.constant 0 : index
    %8 = vector.load %arg7[%c0_6, %c0_7] : memref<16x32xf32, #tpu.memory_space<vmem>>, vector<16x32xf32>
    tpu.vector_store %arg7[%c0_6, %c0_7], %7 {strides = array<i32>} : memref<16x32xf32, #tpu.memory_space<vmem>>, vector<16x32xf32>,
    %c0_i32_8 = arith.constant 0 : i32
    %9 = arith.cmpi eq, %arg2, %c0_i32_8 : i32
    %10 = arith.extui %9 : i1 to i32
    %c0_i32_9 = arith.constant 0 : i32
    %11 = arith.cmpi ne, %10, %c0_i32_9 : i32
    scf.if %11 {
      %c0_10 = arith.constant 0 : index
      %c0_11 = arith.constant 0 : index
      %12 = vector.load %arg7[%c0_10, %c0_11] : memref<16x32xf32, #tpu.memory_space<vmem>>, vector<16x32xf32>
      %c0_12 = arith.constant 0 : index
      %c0_13 = arith.constant 0 : index
      %13 = vector.load %arg5[%c0_12, %c0_13] : memref<16x32xf32, #tpu.memory_space<vmem>>, vector<16x32xf32>
      %14 = arith.addf %12, %13 : vector<16x32xf32>
      %c0_14 = arith.constant 0 : index
      %c0_15 = arith.constant 0 : index
      %15 = vector.load %arg6[%c0_14, %c0_15] : memref<16x32xf32, #tpu.memory_space<vmem>>, vector<16x32xf32>
      tpu.vector_store %arg6[%c0_14, %c0_15], %14 {strides = array<i32>} : memref<16x32xf32, #tpu.memory_space<vmem>>, vector<16x32xf32>,
    } else {
    }
    return
  }
  func.func @transform_0(%arg0: i32, %arg1: i32, %arg2: i32) -> (i32, i32) {
    %c0_i32 = arith.constant 0 : i32
    return %arg0, %arg2 : i32, i32
  }
  func.func @transform_1(%arg0: i32, %arg1: i32, %arg2: i32) -> (i32, i32) {
    %c0_i32 = arith.constant 0 : i32
    return %arg2, %arg1 : i32, i32
  }
  func.func @transform_2(%arg0: i32, %arg1: i32, %arg2: i32) -> (i32, i32) {
    %c0_i32 = arith.constant 0 : i32
    return %arg0, %arg1 : i32, i32
  }
  func.func @transform_3(%arg0: i32, %arg1: i32, %arg2: i32) -> (i32, i32) {
    %c0_i32 = arith.constant 0 : i32
    return %arg0, %arg1 : i32, i32
  }
}

module attributes {stable_mosaic.version = 11 : i64} {
  func.func @_norm_swiglu_kernel(%arg0: i32, %arg1: i32, %arg2: memref<16x32xf32, #tpu.memory_space<vmem>>, %arg3: memref<1x32xf32, #tpu.memory_space<vmem>>, %arg4: memref<32x64xbf16, #tpu.memory_space<vmem>>, %arg5: memref<32x64xbf16, #tpu.memory_space<vmem>>, %arg6: memref<16x64xbf16, #tpu.memory_space<vmem>>) attributes {dimension_semantics = [#tpu.dimension_semantics<parallel>, #tpu.dimension_semantics<parallel>], iteration_bounds = array<i64: 1, 1>, scalar_prefetch = 0 : i64, scratch_operands = 0 : i64, tpu.core_type = #tpu.core_type<tc>, window_params = [{transform_indices = @transform_0, window_bounds = array<i64: 16, 32>}, {pipeline_mode = #tpu.pipeline_mode<synchronous>, transform_indices = @transform_1, window_bounds = array<i64: 1, 32>}, {transform_indices = @transform_2, window_bounds = array<i64: 32, 64>}, {transform_indices = @transform_3, window_bounds = array<i64: 32, 64>}, {transform_indices = @transform_4, window_bounds = array<i64: 16, 64>}]} {
    %c0 = arith.constant 0 : index
    %c0_0 = arith.constant 0 : index
    %0 = vector.load %arg2[%c0, %c0_0] : memref<16x32xf32, #tpu.memory_space<vmem>>, vector<16x32xf32>
    %1 = arith.mulf %0, %0 : vector<16x32xf32>
    %cst = arith.constant dense<0.000000e+00> : vector<16xf32>
    %2 = vector.multi_reduction <add>, %1, %cst [1] : vector<16x32xf32> to vector<16xf32>
    %3 = vector.shape_cast %2 : vector<16xf32> to vector<16x1xf32>
    %cst_1 = arith.constant 3.200000e+01 : f32
    %4 = vector.broadcast %cst_1 : f32 to vector<16x1xf32>
    %5 = arith.divf %3, %4 : vector<16x1xf32>
    %cst_2 = arith.constant 9.99999997E-7 : f32
    %6 = vector.broadcast %cst_2 : f32 to vector<16x1xf32>
    %7 = arith.addf %5, %6 : vector<16x1xf32>
    %8 = math.rsqrt %7 : vector<16x1xf32>
    %9 = vector.broadcast %8 : vector<16x1xf32> to vector<16x32xf32>
    %10 = arith.mulf %0, %9 : vector<16x32xf32>
    %c0_3 = arith.constant 0 : index
    %c0_4 = arith.constant 0 : index
    %11 = vector.load %arg3[%c0_3, %c0_4] : memref<1x32xf32, #tpu.memory_space<vmem>>, vector<1x32xf32>
    %12 = vector.broadcast %11 : vector<1x32xf32> to vector<16x32xf32>
    %13 = arith.mulf %10, %12 : vector<16x32xf32>
    %14 = arith.truncf %13 : vector<16x32xf32> to vector<16x32xbf16>
    %c0_5 = arith.constant 0 : index
    %c0_6 = arith.constant 0 : index
    %15 = vector.load %arg4[%c0_5, %c0_6] : memref<32x64xbf16, #tpu.memory_space<vmem>>, vector<32x64xbf16>
    %cst_7 = arith.constant dense<0.000000e+00> : vector<16x64xf32>
    %16 = tpu.matmul %14, %15, %cst_7 {dimension_numbers = #tpu.dot_dimension_numbers<[1], [0], [0], [1], [0, 0, 1, 1], [], []>} : vector<16x32xbf16>, vector<32x64xbf16>, vector<16x64xf32> -> vector<16x64xf32>
    %c0_8 = arith.constant 0 : index
    %c0_9 = arith.constant 0 : index
    %17 = vector.load %arg5[%c0_8, %c0_9] : memref<32x64xbf16, #tpu.memory_space<vmem>>, vector<32x64xbf16>
    %cst_10 = arith.constant dense<0.000000e+00> : vector<16x64xf32>
    %18 = tpu.matmul %14, %17, %cst_10 {dimension_numbers = #tpu.dot_dimension_numbers<[1], [0], [0], [1], [0, 0, 1, 1], [], []>} : vector<16x32xbf16>, vector<32x64xbf16>, vector<16x64xf32> -> vector<16x64xf32>
    %19 = arith.negf %16 : vector<16x64xf32>
    %20 = math.exp %19 : vector<16x64xf32>
    %cst_11 = arith.constant 1.000000e+00 : f32
    %21 = vector.broadcast %cst_11 : f32 to vector<16x64xf32>
    %22 = arith.addf %21, %20 : vector<16x64xf32>
    %23 = arith.divf %21, %22 : vector<16x64xf32>
    %24 = arith.mulf %16, %23 : vector<16x64xf32>
    %25 = arith.mulf %24, %18 : vector<16x64xf32>
    %26 = arith.truncf %25 : vector<16x64xf32> to vector<16x64xbf16>
    %c0_12 = arith.constant 0 : index
    %c0_13 = arith.constant 0 : index
    %27 = vector.load %arg6[%c0_12, %c0_13] : memref<16x64xbf16, #tpu.memory_space<vmem>>, vector<16x64xbf16>
    tpu.vector_store %arg6[%c0_12, %c0_13], %26 {strides = array<i32>} : memref<16x64xbf16, #tpu.memory_space<vmem>>, vector<16x64xbf16>,
    return
  }
  func.func @transform_0(%arg0: i32, %arg1: i32) -> (i32, i32) {
    %c0_i32 = arith.constant 0 : i32
    %c0_i32_0 = arith.constant 0 : i32
    return %arg0, %c0_i32 : i32, i32
  }
  func.func @transform_1(%arg0: i32, %arg1: i32) -> (i32, i32) {
    %c0_i32 = arith.constant 0 : i32
    %c0_i32_0 = arith.constant 0 : i32
    %c0_i32_1 = arith.constant 0 : i32
    return %c0_i32, %c0_i32_0 : i32, i32
  }
  func.func @transform_2(%arg0: i32, %arg1: i32) -> (i32, i32) {
    %c0_i32 = arith.constant 0 : i32
    %c0_i32_0 = arith.constant 0 : i32
    return %c0_i32, %arg1 : i32, i32
  }
  func.func @transform_3(%arg0: i32, %arg1: i32) -> (i32, i32) {
    %c0_i32 = arith.constant 0 : i32
    %c0_i32_0 = arith.constant 0 : i32
    return %c0_i32, %arg1 : i32, i32
  }
  func.func @transform_4(%arg0: i32, %arg1: i32) -> (i32, i32) {
    %c0_i32 = arith.constant 0 : i32
    return %arg0, %arg1 : i32, i32
  }
}

module attributes {stable_mosaic.version = 11 : i64} {
  func.func @_lmhead_loss_kernel(%arg0: i32, %arg1: i32, %arg2: memref<16x32xf32, #tpu.memory_space<vmem>>, %arg3: memref<1x32xf32, #tpu.memory_space<vmem>>, %arg4: memref<32x64xbf16, #tpu.memory_space<vmem>>, %arg5: memref<16x1xi32, #tpu.memory_space<vmem>>, %arg6: memref<16x64xf32, #tpu.memory_space<vmem>>, %arg7: memref<16x1xf32, #tpu.memory_space<vmem>>, %arg8: memref<16x32xbf16, #tpu.memory_space<vmem>>, %arg9: memref<16x1xf32, #tpu.memory_space<vmem>>, %arg10: memref<16x1xf32, #tpu.memory_space<vmem>>, %arg11: memref<16x1xf32, #tpu.memory_space<vmem>>) attributes {dimension_semantics = [#tpu.dimension_semantics<parallel>, #tpu.dimension_semantics<arbitrary>], iteration_bounds = array<i64: 1, 1>, scalar_prefetch = 0 : i64, scratch_operands = 4 : i64, tpu.core_type = #tpu.core_type<tc>, window_params = [{transform_indices = @transform_0, window_bounds = array<i64: 16, 32>}, {pipeline_mode = #tpu.pipeline_mode<synchronous>, transform_indices = @transform_1, window_bounds = array<i64: 1, 32>}, {transform_indices = @transform_2, window_bounds = array<i64: 32, 64>}, {transform_indices = @transform_3, window_bounds = array<i64: 16, 1>}, {transform_indices = @transform_4, window_bounds = array<i64: 16, 64>}, {transform_indices = @transform_5, window_bounds = array<i64: 16, 1>}]} {
    %c0_i32 = arith.constant 0 : i32
    %0 = arith.cmpi eq, %arg1, %c0_i32 : i32
    %1 = arith.extui %0 : i1 to i32
    %c0_i32_0 = arith.constant 0 : i32
    %2 = arith.cmpi ne, %1, %c0_i32_0 : i32
    scf.if %2 {
      %c0_26 = arith.constant 0 : index
      %c0_27 = arith.constant 0 : index
      %40 = vector.load %arg2[%c0_26, %c0_27] : memref<16x32xf32, #tpu.memory_space<vmem>>, vector<16x32xf32>
      %41 = arith.mulf %40, %40 : vector<16x32xf32>
      %cst_28 = arith.constant dense<0.000000e+00> : vector<16xf32>
      %42 = vector.multi_reduction <add>, %41, %cst_28 [1] : vector<16x32xf32> to vector<16xf32>
      %43 = vector.shape_cast %42 : vector<16xf32> to vector<16x1xf32>
      %cst_29 = arith.constant 3.200000e+01 : f32
      %44 = vector.broadcast %cst_29 : f32 to vector<16x1xf32>
      %45 = arith.divf %43, %44 : vector<16x1xf32>
      %cst_30 = arith.constant 9.99999997E-7 : f32
      %46 = vector.broadcast %cst_30 : f32 to vector<16x1xf32>
      %47 = arith.addf %45, %46 : vector<16x1xf32>
      %48 = math.rsqrt %47 : vector<16x1xf32>
      %49 = vector.broadcast %48 : vector<16x1xf32> to vector<16x32xf32>
      %50 = arith.mulf %40, %49 : vector<16x32xf32>
      %c0_31 = arith.constant 0 : index
      %c0_32 = arith.constant 0 : index
      %51 = vector.load %arg3[%c0_31, %c0_32] : memref<1x32xf32, #tpu.memory_space<vmem>>, vector<1x32xf32>
      %52 = vector.broadcast %51 : vector<1x32xf32> to vector<16x32xf32>
      %53 = arith.mulf %50, %52 : vector<16x32xf32>
      %54 = arith.truncf %53 : vector<16x32xf32> to vector<16x32xbf16>
      %c0_33 = arith.constant 0 : index
      %c0_34 = arith.constant 0 : index
      %55 = vector.load %arg8[%c0_33, %c0_34] : memref<16x32xbf16, #tpu.memory_space<vmem>>, vector<16x32xbf16>
      tpu.vector_store %arg8[%c0_33, %c0_34], %54 {strides = array<i32>} : memref<16x32xbf16, #tpu.memory_space<vmem>>, vector<16x32xbf16>,
      %cst_35 = arith.constant -1.000000e+30 : f32
      %56 = vector.broadcast %cst_35 : f32 to vector<16x1xf32>
      %c0_36 = arith.constant 0 : index
      %c0_37 = arith.constant 0 : index
      %57 = vector.load %arg9[%c0_36, %c0_37] : memref<16x1xf32, #tpu.memory_space<vmem>>, vector<16x1xf32>
      tpu.vector_store %arg9[%c0_36, %c0_37], %56 {strides = array<i32>} : memref<16x1xf32, #tpu.memory_space<vmem>>, vector<16x1xf32>,
      %cst_38 = arith.constant 0.000000e+00 : f32
      %58 = vector.broadcast %cst_38 : f32 to vector<16x1xf32>
      %c0_39 = arith.constant 0 : index
      %c0_40 = arith.constant 0 : index
      %59 = vector.load %arg10[%c0_39, %c0_40] : memref<16x1xf32, #tpu.memory_space<vmem>>, vector<16x1xf32>
      tpu.vector_store %arg10[%c0_39, %c0_40], %58 {strides = array<i32>} : memref<16x1xf32, #tpu.memory_space<vmem>>, vector<16x1xf32>,
      %cst_41 = arith.constant 0.000000e+00 : f32
      %60 = vector.broadcast %cst_41 : f32 to vector<16x1xf32>
      %c0_42 = arith.constant 0 : index
      %c0_43 = arith.constant 0 : index
      %61 = vector.load %arg11[%c0_42, %c0_43] : memref<16x1xf32, #tpu.memory_space<vmem>>, vector<16x1xf32>
      tpu.vector_store %arg11[%c0_42, %c0_43], %60 {strides = array<i32>} : memref<16x1xf32, #tpu.memory_space<vmem>>, vector<16x1xf32>,
    } else {
    }
    %c0 = arith.constant 0 : index
    %c0_1 = arith.constant 0 : index
    %3 = vector.load %arg8[%c0, %c0_1] : memref<16x32xbf16, #tpu.memory_space<vmem>>, vector<16x32xbf16>
    %c0_2 = arith.constant 0 : index
    %c0_3 = arith.constant 0 : index
    %4 = vector.load %arg4[%c0_2, %c0_3] : memref<32x64xbf16, #tpu.memory_space<vmem>>, vector<32x64xbf16>
    %cst = arith.constant dense<0.000000e+00> : vector<16x64xf32>
    %5 = tpu.matmul %3, %4, %cst {dimension_numbers = #tpu.dot_dimension_numbers<[1], [0], [0], [1], [0, 0, 1, 1], [], []>} : vector<16x32xbf16>, vector<32x64xbf16>, vector<16x64xf32> -> vector<16x64xf32>
    %c0_4 = arith.constant 0 : index
    %c0_5 = arith.constant 0 : index
    %6 = vector.load %arg6[%c0_4, %c0_5] : memref<16x64xf32, #tpu.memory_space<vmem>>, vector<16x64xf32>
    tpu.vector_store %arg6[%c0_4, %c0_5], %5 {strides = array<i32>} : memref<16x64xf32, #tpu.memory_space<vmem>>, vector<16x64xf32>,
    %c0_6 = arith.constant 0 : index
    %c0_7 = arith.constant 0 : index
    %7 = vector.load %arg9[%c0_6, %c0_7] : memref<16x1xf32, #tpu.memory_space<vmem>>, vector<16x1xf32>
    %cst_8 = arith.constant dense<0xFF800000> : vector<16xf32>
    %8 = vector.multi_reduction <maximumf>, %5, %cst_8 [1] : vector<16x64xf32> to vector<16xf32>
    %9 = vector.shape_cast %8 : vector<16xf32> to vector<16x1xf32>
    %10 = arith.maximumf %7, %9 : vector<16x1xf32>
    %11 = arith.subf %7, %10 : vector<16x1xf32>
    %12 = math.exp %11 : vector<16x1xf32>
    %c0_9 = arith.constant 0 : index
    %c0_10 = arith.constant 0 : index
    %13 = vector.load %arg10[%c0_9, %c0_10] : memref<16x1xf32, #tpu.memory_space<vmem>>, vector<16x1xf32>
    %14 = arith.mulf %12, %13 : vector<16x1xf32>
    %15 = vector.broadcast %10 : vector<16x1xf32> to vector<16x64xf32>
    %16 = arith.subf %5, %15 : vector<16x64xf32>
    %17 = math.exp %16 : vector<16x64xf32>
    %cst_11 = arith.constant dense<0.000000e+00> : vector<16xf32>
    %18 = vector.multi_reduction <add>, %17, %cst_11 [1] : vector<16x64xf32> to vector<16xf32>
    %19 = vector.shape_cast %18 : vector<16xf32> to vector<16x1xf32>
    %20 = arith.addf %14, %19 : vector<16x1xf32>
    %c0_12 = arith.constant 0 : index
    %c0_13 = arith.constant 0 : index
    %21 = vector.load %arg10[%c0_12, %c0_13] : memref<16x1xf32, #tpu.memory_space<vmem>>, vector<16x1xf32>
    tpu.vector_store %arg10[%c0_12, %c0_13], %20 {strides = array<i32>} : memref<16x1xf32, #tpu.memory_space<vmem>>, vector<16x1xf32>,
    %c0_14 = arith.constant 0 : index
    %c0_15 = arith.constant 0 : index
    %22 = vector.load %arg9[%c0_14, %c0_15] : memref<16x1xf32, #tpu.memory_space<vmem>>, vector<16x1xf32>
    tpu.vector_store %arg9[%c0_14, %c0_15], %10 {strides = array<i32>} : memref<16x1xf32, #tpu.memory_space<vmem>>, vector<16x1xf32>,
    %c64_i32 = arith.constant 64 : i32
    %23 = arith.muli %arg1, %c64_i32 : i32
    %24 = tpu.iota {dimensions = array<i32: 1>} : vector<16x64xi32>
    %25 = vector.broadcast %23 : i32 to vector<16x64xi32>
    %26 = arith.addi %25, %24 : vector<16x64xi32>
    %c0_16 = arith.constant 0 : index
    %c0_17 = arith.constant 0 : index
    %27 = vector.load %arg11[%c0_16, %c0_17] : memref<16x1xf32, #tpu.memory_space<vmem>>, vector<16x1xf32>
    %c0_18 = arith.constant 0 : index
    %c0_19 = arith.constant 0 : index
    %28 = vector.load %arg5[%c0_18, %c0_19] : memref<16x1xi32, #tpu.memory_space<vmem>>, vector<16x1xi32>
    %29 = vector.broadcast %28 : vector<16x1xi32> to vector<16x64xi32>
    %30 = arith.cmpi eq, %26, %29 : vector<16x64xi32>
    %cst_20 = arith.constant 0.000000e+00 : f32
    %31 = vector.broadcast %cst_20 : f32 to vector<16x64xf32>
    %32 = arith.select %30, %5, %31 : vector<16x64xi1>, vector<16x64xf32>
    %cst_21 = arith.constant dense<0.000000e+00> : vector<16xf32>
    %33 = vector.multi_reduction <add>, %32, %cst_21 [1] : vector<16x64xf32> to vector<16xf32>
    %34 = vector.shape_cast %33 : vector<16xf32> to vector<16x1xf32>
    %35 = arith.addf %27, %34 : vector<16x1xf32>
    %c0_22 = arith.constant 0 : index
    %c0_23 = arith.constant 0 : index
    %36 = vector.load %arg11[%c0_22, %c0_23] : memref<16x1xf32, #tpu.memory_space<vmem>>, vector<16x1xf32>
    tpu.vector_store %arg11[%c0_22, %c0_23], %35 {strides = array<i32>} : memref<16x1xf32, #tpu.memory_space<vmem>>, vector<16x1xf32>,
    %c0_i32_24 = arith.constant 0 : i32
    %37 = arith.cmpi eq, %arg1, %c0_i32_24 : i32
    %38 = arith.extui %37 : i1 to i32
    %c0_i32_25 = arith.constant 0 : i32
    %39 = arith.cmpi ne, %38, %c0_i32_25 : i32
    scf.if %39 {
      %c0_26 = arith.constant 0 : index
      %c0_27 = arith.constant 0 : index
      %40 = vector.load %arg9[%c0_26, %c0_27] : memref<16x1xf32, #tpu.memory_space<vmem>>, vector<16x1xf32>
      %c0_28 = arith.constant 0 : index
      %c0_29 = arith.constant 0 : index
      %41 = vector.load %arg10[%c0_28, %c0_29] : memref<16x1xf32, #tpu.memory_space<vmem>>, vector<16x1xf32>
      %42 = math.log %41 : vector<16x1xf32>
      %43 = arith.addf %40, %42 : vector<16x1xf32>
      %c0_30 = arith.constant 0 : index
      %c0_31 = arith.constant 0 : index
      %44 = vector.load %arg11[%c0_30, %c0_31] : memref<16x1xf32, #tpu.memory_space<vmem>>, vector<16x1xf32>
      %45 = arith.subf %43, %44 : vector<16x1xf32>
      %c0_32 = arith.constant 0 : index
      %c0_33 = arith.constant 0 : index
      %46 = vector.load %arg7[%c0_32, %c0_33] : memref<16x1xf32, #tpu.memory_space<vmem>>, vector<16x1xf32>
      tpu.vector_store %arg7[%c0_32, %c0_33], %45 {strides = array<i32>} : memref<16x1xf32, #tpu.memory_space<vmem>>, vector<16x1xf32>,
    } else {
    }
    return
  }
  func.func @transform_0(%arg0: i32, %arg1: i32) -> (i32, i32) {
    %c0_i32 = arith.constant 0 : i32
    %c0_i32_0 = arith.constant 0 : i32
    return %arg0, %c0_i32 : i32, i32
  }
  func.func @transform_1(%arg0: i32, %arg1: i32) -> (i32, i32) {
    %c0_i32 = arith.constant 0 : i32
    %c0_i32_0 = arith.constant 0 : i32
    %c0_i32_1 = arith.constant 0 : i32
    return %c0_i32, %c0_i32_0 : i32, i32
  }
  func.func @transform_2(%arg0: i32, %arg1: i32) -> (i32, i32) {
    %c0_i32 = arith.constant 0 : i32
    %c0_i32_0 = arith.constant 0 : i32
    return %c0_i32, %arg1 : i32, i32
  }
  func.func @transform_3(%arg0: i32, %arg1: i32) -> (i32, i32) {
    %c0_i32 = arith.constant 0 : i32
    %c0_i32_0 = arith.constant 0 : i32
    return %arg0, %c0_i32 : i32, i32
  }
  func.func @transform_4(%arg0: i32, %arg1: i32) -> (i32, i32) {
    %c0_i32 = arith.constant 0 : i32
    return %arg0, %arg1 : i32, i32
  }
  func.func @transform_5(%arg0: i32, %arg1: i32) -> (i32, i32) {
    %c0_i32 = arith.constant 0 : i32
    %c0_i32_0 = arith.constant 0 : i32
    return %arg0, %c0_i32 : i32, i32
  }
}

</mosaic_0001>

<llo_original>
// kernel: _lambda_.8
$region0: #{_lambda_.8}
  #allocation0 [shape = 'u32[]', space=smem, size = 0x4, offset = 0x4, fixed_abs, tag = 'smem constant byte address 0x4 - core index']
  #allocation1 [shape = 'u32[144,128]{1,0:T(1,128)}', space=vmem, size = 0x12000, scoped, tag = 'internal scratch']
  %s0 = inlined_call_operand.vmem [shape: f32[16,32], index: 0, kind: input, shape index: {}]
  %s1 = inlined_call_operand.vmem [shape: f32[1,32], index: 1, kind: input, shape index: {}]
  %s2 = inlined_call_operand.vmem [shape: bf16[32,64], index: 2, kind: input, shape index: {}]
  %s3 = inlined_call_operand.vmem [shape: bf16[16,64], index: 3, kind: output, shape index: {}]
  %s4 = sld [smem:[#allocation0]]
  $region22: #{_lambda_.8} parent=0
    _
  %s6 = ssub.s32 1, %s4
  %s7 = scalar_select 0, %s6, %s4
  // Predicated region
  $region2: #{_lambda_.8} parent=0 // pred_check
    _
  $region3: #{_lambda_.8} parent=0 // pred_check_branch
    %9 = sbr.rel (0) target = $region5
  $region4: #{_lambda_.8} parent=0 // pred_region
    _
  $region5: #{_lambda_.8} parent=0 // pred_fallthru
    _
  // Predicated region
  $region6: #{_lambda_.8} parent=0 // pred_check
    _
  $region7: #{_lambda_.8} parent=0 // pred_check_branch
    %11 = sbr.rel (0) target = $region9
  $region8: #{_lambda_.8} parent=0 // pred_region
    _
  $region9: #{_lambda_.8} parent=0 // pred_fallthru
    _
  // Predicated region
  $region10: #{_lambda_.8} parent=0 // pred_check
    _
  $region11: #{_lambda_.8} parent=0 // pred_check_branch
    %13 = sbr.rel (0) target = $region13
  $region12: #{_lambda_.8} parent=0 // pred_region
    _
  $region13: #{_lambda_.8} parent=0 // pred_fallthru
    _
  %v15 = vld [vmem:[%s0] sm:$0xff]
  %v16 = vld [vmem:[%s0 + $0x8] sm:$0xff]
  %v17 = vmul.f32 %v15, %v15
  %v18 = vmul.f32 %v16, %v16
  %vm19 = vcmask 261120
  %v20 = vsel %vm19, %v17, 0.0
  %21 = vadd.xlane.f32.xlu0 %v20
  %v22 = vpop.xlane.xlu0 %21
  %v23 = vsel %vm19, %v18, 0.0
  %24 = vadd.xlane.f32.xlu0 %v23
  %v25 = vpop.xlane.xlu0 %24
  %v26 = vrcp.pop 32.0
  %v27 = vmul.f32 %v22, %v26
  %v28 = vmul.f32 %v25, %v26
  %v29 = vadd.f32 %v27, 1e-06
  %v30 = vadd.f32 %v28, 1e-06
  %v31 = vrsqrt.pop %v29
  %v32 = vrsqrt.pop %v30
  %v33 = vmul.f32 %v15, %v31
  %v34 = vmul.f32 %v16, %v32
  %v35 = vld [vmem:[%s1] sm:$0x1]
  %v37 = vlaneseq
  %v38 = vshrl.u32 %v37, 7
  %v39 = vsub.s32 0, %v38
  %v40 = vrot.slane %v35, %v39
  %v42 = vmul.f32 %v33, %v40
  %v43 = vmul.f32 %v34, %v40
  %v44 = vpack.c.bf16 %v43, %v42
  %v45 = vld [vmem:[%s2] sm:$0xf]
  %v46 = vld [vmem:[%s2 + $0x4] sm:$0xf]
  %v47 = vld [vmem:[%s2 + $0x8] sm:$0xf]
  %v48 = vld [vmem:[%s2 + $0xc] sm:$0xf]
  %v53 = vunpack.c.l.b16 %v45
  %v54 = vunpack.c.l.b16 %v46
  %v55 = vunpack.c.l.b16 %v47
  %v56 = vunpack.c.l.b16 %v48
  %v57 = vpack.c.b16 %v54, %v53
  %v58 = vpack.c.b16 %v56, %v55
  %v62 = vsel %vm19, %v44, 0
  %64 = vmatprep.subr.bf16.mxu0 0
  %65 = vmatpush1.bf16.msra.mxu0 0
  %66 = vmatprep.subr.bf16.mxu0 0
  %67 = vmatpush1.bf16.msra.mxu0 0
  %68 = vmatprep.subr.bf16.mxu0 0
  %69 = vmatpush1.bf16.msra.mxu0 0
  %70 = vmatprep.subr.bf16.mxu0 0
  %71 = vmatpush1.bf16.msra.mxu0 0
  %72 = vmatprep.subr.bf16.mxu0 0
  %73 = vmatpush1.bf16.msra.mxu0 0
  %74 = vmatprep.subr.bf16.mxu0 0
  %75 = vmatpush1.bf16.msra.mxu0 0
  %76 = vmatprep.subr.bf16.mxu0 0
  %77 = vmatpush1.bf16.msra.mxu0 %v58
  %78 = vmatprep.subr.bf16.mxu0 0
  %79 = vmatpush1.bf16.msra.mxu0 %v57
  %80 = vmatprep.subr.bf16.mxu0 0
  %81 = vmatpush2.bf16.msra.mxu0 0
  %82 = vmatprep.subr.bf16.mxu0 0
  %83 = vmatpush2.bf16.msra.mxu0 0
  %84 = vmatprep.subr.bf16.mxu0 0
  %85 = vmatpush2.bf16.msra.mxu0 0
  %86 = vmatprep.subr.bf16.mxu0 0
  %87 = vmatpush2.bf16.msra.mxu0 0
  %88 = vmatprep.subr.bf16.mxu0 0
  %89 = vmatpush2.bf16.msra.mxu0 0
  %90 = vmatprep.subr.bf16.mxu0 0
  %91 = vmatpush2.bf16.msra.mxu0 0
  %92 = vmatprep.subr.bf16.mxu0 0
  %93 = vmatpush2.bf16.msra.mxu0 0
  %94 = vmatprep.subr.bf16.mxu0 0
  %95 = vmatpush2.bf16.msra.mxu0 0
  %96 = vmatprep.mubr.bf16.mxu0 0
  %97 = vmatmul.mubr.bf16.gmra.mxu0 %v62
  %v98 = vpop.f32.mrf.mxu0
  %v99 = vadd.f32 0.0, %v98
  %v100 = vpop.f32.mrf.mxu0
  %v101 = vpop.f32.mrf.mxu0
  %v102 = vadd.f32 0.0, %v101
  %v103 = vpop.f32.mrf.mxu0
  %104 = vdwg.mxu0
  %v105 = vpack.c.bf16 %v102, %v99
  %v107 = vunpack.c.l.b16 %v105
  %v108 = vunpack.c.h.b16 %v105
  %v109 = vpack.c.b16 %v107, %v107
  %v110 = vpack.c.b16 %v108, %v108
  %vm113 = vcmask 519168
  %114 = vst.msk [vmem:[%s3] sm:$0xf] %vm113, %v109
  %115 = vst.msk [vmem:[%s3 + $0x4] sm:$0xf] %vm113, %v110
  // Predicated region
  $region14: #{_lambda_.8} parent=0 // pred_check
    _
  $region15: #{_lambda_.8} parent=0 // pred_check_branch
    %117 = sbr.rel (0) target = $region17
  $region16: #{_lambda_.8} parent=0 // pred_region
    _
  $region17: #{_lambda_.8} parent=0 // pred_fallthru
    _
  // Predicated region
  $region18: #{_lambda_.8} parent=0 // pred_check
    _
  $region19: #{_lambda_.8} parent=0 // pred_check_branch
    %119 = sbr.rel (0) target = $region21
  $region20: #{_lambda_.8} parent=0 // pred_region
    _
  $region21: #{_lambda_.8} parent=0 // pred_fallthru
    _

// kernel: _lambda_.7
$region0: #{_lambda_.7}
  #allocation0 [shape = 'u32[]', space=smem, size = 0x4, offset = 0x4, fixed_abs, tag = 'smem constant byte address 0x4 - core index']
  #allocation1 [shape = 'u32[144,128]{1,0:T(1,128)}', space=vmem, size = 0x12000, scoped, tag = 'internal scratch']
  %s0 = inlined_call_operand.vmem [shape: f32[16,32], index: 0, kind: input, shape index: {}]
  %s1 = inlined_call_operand.vmem [shape: f32[1,32], index: 1, kind: input, shape index: {}]
  %s2 = inlined_call_operand.vmem [shape: bf16[32,96], index: 2, kind: input, shape index: {}]
  %s3 = inlined_call_operand.vmem [shape: bf16[16,96], index: 3, kind: output, shape index: {}]
  %s4 = sld [smem:[#allocation0]]
  $region22: #{_lambda_.7} parent=0
    _
  %s6 = ssub.s32 1, %s4
  %s7 = scalar_select 0, %s6, %s4
  // Predicated region
  $region2: #{_lambda_.7} parent=0 // pred_check
    _
  $region3: #{_lambda_.7} parent=0 // pred_check_branch
    %9 = sbr.rel (0) target = $region5
  $region4: #{_lambda_.7} parent=0 // pred_region
    _
  $region5: #{_lambda_.7} parent=0 // pred_fallthru
    _
  // Predicated region
  $region6: #{_lambda_.7} parent=0 // pred_check
    _
  $region7: #{_lambda_.7} parent=0 // pred_check_branch
    %11 = sbr.rel (0) target = $region9
  $region8: #{_lambda_.7} parent=0 // pred_region
    _
  $region9: #{_lambda_.7} parent=0 // pred_fallthru
    _
  // Predicated region
  $region10: #{_lambda_.7} parent=0 // pred_check
    _
  $region11: #{_lambda_.7} parent=0 // pred_check_branch
    %13 = sbr.rel (0) target = $region13
  $region12: #{_lambda_.7} parent=0 // pred_region
    _
  $region13: #{_lambda_.7} parent=0 // pred_fallthru
    _
  %v15 = vld [vmem:[%s0] sm:$0xff]
  %v16 = vld [vmem:[%s0 + $0x8] sm:$0xff]
  %v17 = vmul.f32 %v15, %v15
  %v18 = vmul.f32 %v16, %v16
  %vm19 = vcmask 261120
  %v20 = vsel %vm19, %v17, 0.0
  %21 = vadd.xlane.f32.xlu0 %v20
  %v22 = vpop.xlane.xlu0 %21
  %v23 = vsel %vm19, %v18, 0.0
  %24 = vadd.xlane.f32.xlu0 %v23
  %v25 = vpop.xlane.xlu0 %24
  %v26 = vrcp.pop 32.0
  %v27 = vmul.f32 %v22, %v26
  %v28 = vmul.f32 %v25, %v26
  %v29 = vadd.f32 %v27, 1e-06
  %v30 = vadd.f32 %v28, 1e-06
  %v31 = vrsqrt.pop %v29
  %v32 = vrsqrt.pop %v30
  %v33 = vmul.f32 %v15, %v31
  %v34 = vmul.f32 %v16, %v32
  %v35 = vld [vmem:[%s1] sm:$0x1]
  %v37 = vlaneseq
  %v38 = vshrl.u32 %v37, 7
  %v39 = vsub.s32 0, %v38
  %v40 = vrot.slane %v35, %v39
  %v42 = vmul.f32 %v33, %v40
  %v43 = vmul.f32 %v34, %v40
  %v44 = vpack.c.bf16 %v43, %v42
  %v45 = vld [vmem:[%s2] sm:$0xf]
  %v46 = vld [vmem:[%s2 + $0x4] sm:$0xf]
  %v47 = vld [vmem:[%s2 + $0x8] sm:$0xf]
  %v48 = vld [vmem:[%s2 + $0xc] sm:$0xf]
  %v53 = vunpack.c.l.b16 %v45
  %v54 = vunpack.c.l.b16 %v46
  %v55 = vunpack.c.l.b16 %v47
  %v56 = vunpack.c.l.b16 %v48
  %v57 = vpack.c.b16 %v54, %v53
  %v58 = vpack.c.b16 %v56, %v55
  %v62 = vsel %vm19, %v44, 0
  %64 = vmatprep.subr.bf16.mxu0 0
  %65 = vmatpush1.bf16.msra.mxu0 0
  %66 = vmatprep.subr.bf16.mxu0 0
  %67 = vmatpush1.bf16.msra.mxu0 0
  %68 = vmatprep.subr.bf16.mxu0 0
  %69 = vmatpush1.bf16.msra.mxu0 0
  %70 = vmatprep.subr.bf16.mxu0 0
  %71 = vmatpush1.bf16.msra.mxu0 0
  %72 = vmatprep.subr.bf16.mxu0 0
  %73 = vmatpush1.bf16.msra.mxu0 0
  %74 = vmatprep.subr.bf16.mxu0 0
  %75 = vmatpush1.bf16.msra.mxu0 0
  %76 = vmatprep.subr.bf16.mxu0 0
  %77 = vmatpush1.bf16.msra.mxu0 %v58
  %78 = vmatprep.subr.bf16.mxu0 0
  %79 = vmatpush1.bf16.msra.mxu0 %v57
  %80 = vmatprep.subr.bf16.mxu0 0
  %81 = vmatpush2.bf16.msra.mxu0 0
  %82 = vmatprep.subr.bf16.mxu0 0
  %83 = vmatpush2.bf16.msra.mxu0 0
  %84 = vmatprep.subr.bf16.mxu0 0
  %85 = vmatpush2.bf16.msra.mxu0 0
  %86 = vmatprep.subr.bf16.mxu0 0
  %87 = vmatpush2.bf16.msra.mxu0 0
  %88 = vmatprep.subr.bf16.mxu0 0
  %89 = vmatpush2.bf16.msra.mxu0 0
  %90 = vmatprep.subr.bf16.mxu0 0
  %91 = vmatpush2.bf16.msra.mxu0 0
  %92 = vmatprep.subr.bf16.mxu0 0
  %93 = vmatpush2.bf16.msra.mxu0 0
  %94 = vmatprep.subr.bf16.mxu0 0
  %95 = vmatpush2.bf16.msra.mxu0 0
  %96 = vmatprep.mubr.bf16.mxu0 0
  %97 = vmatmul.mubr.bf16.gmra.mxu0 %v62
  %v98 = vpop.f32.mrf.mxu0
  %v99 = vadd.f32 0.0, %v98
  %v100 = vpop.f32.mrf.mxu0
  %v101 = vpop.f32.mrf.mxu0
  %v102 = vadd.f32 0.0, %v101
  %v103 = vpop.f32.mrf.mxu0
  %104 = vdwg.mxu0
  %v105 = vpack.c.bf16 %v102, %v99
  %v107 = vunpack.c.l.b16 %v105
  %v108 = vunpack.c.h.b16 %v105
  %v109 = vpack.c.b16 %v107, %v107
  %v110 = vpack.c.b16 %v108, %v108
  %vm113 = vcmask 781312
  %114 = vst.msk [vmem:[%s3] sm:$0xf] %vm113, %v109
  %115 = vst.msk [vmem:[%s3 + $0x4] sm:$0xf] %vm113, %v110
  // Predicated region
  $region14: #{_lambda_.7} parent=0 // pred_check
    _
  $region15: #{_lambda_.7} parent=0 // pred_check_branch
    %117 = sbr.rel (0) target = $region17
  $region16: #{_lambda_.7} parent=0 // pred_region
    _
  $region17: #{_lambda_.7} parent=0 // pred_fallthru
    _
  // Predicated region
  $region18: #{_lambda_.7} parent=0 // pred_check
    _
  $region19: #{_lambda_.7} parent=0 // pred_check_branch
    %119 = sbr.rel (0) target = $region21
  $region20: #{_lambda_.7} parent=0 // pred_region
    _
  $region21: #{_lambda_.7} parent=0 // pred_fallthru
    _

// kernel: _lambda_.10
$region0: #{_lambda_.10}
  #allocation0 [shape = 'u32[]', space=smem, size = 0x4, offset = 0x4, fixed_abs, tag = 'smem constant byte address 0x4 - core index']
  #allocation1 [shape = 'u32[144,128]{1,0:T(1,128)}', space=vmem, size = 0x12000, scoped, tag = 'internal scratch']
  #allocation2 [shape = 'f32[16,32]{1,0:T(8,128)}', space=vmem, size = 0x2000, scoped, tag = 'scratch operand']
  %s0 = inlined_call_operand.vmem [shape: bf16[16,32], index: 0, kind: input, shape index: {}]
  %s1 = inlined_call_operand.vmem [shape: bf16[32,32], index: 1, kind: input, shape index: {}]
  %s2 = inlined_call_operand.vmem [shape: f32[16,32], index: 2, kind: input, shape index: {}]
  %s3 = inlined_call_operand.vmem [shape: f32[16,32], index: 3, kind: output, shape index: {}]
  %s4 = sld [smem:[#allocation0]]
  $region30: #{_lambda_.10} parent=0
    _
  %s6 = ssub.s32 1, %s4
  %s7 = scalar_select 0, %s6, %s4
  // Predicated region
  $region2: #{_lambda_.10} parent=0 // pred_check
    _
  $region3: #{_lambda_.10} parent=0 // pred_check_branch
    %9 = sbr.rel (0) target = $region5
  $region4: #{_lambda_.10} parent=0 // pred_region
    _
  $region5: #{_lambda_.10} parent=0 // pred_fallthru
    _
  // Predicated region
  $region6: #{_lambda_.10} parent=0 // pred_check
    _
  $region7: #{_lambda_.10} parent=0 // pred_check_branch
    %11 = sbr.rel (0) target = $region9
  $region8: #{_lambda_.10} parent=0 // pred_region
    _
  $region9: #{_lambda_.10} parent=0 // pred_fallthru
    _
  // Predicated region
  $region10: #{_lambda_.10} parent=0 // pred_check
    _
  $region11: #{_lambda_.10} parent=0 // pred_check_branch
    %13 = sbr.rel (0) target = $region13
  $region12: #{_lambda_.10} parent=0 // pred_region
    _
  $region13: #{_lambda_.10} parent=0 // pred_fallthru
    _
  %p15 = scmp.eq.s32.totalorder 0, 0
  // Predicated region
  $region14: #{_lambda_.10} parent=0 // pred_check
    %p16 = pneg %p15
  $region15: #{_lambda_.10} parent=0 // pred_check_branch
    %18 = sbr.rel (%p16) target = $region17
  $region16: #{_lambda_.10} parent=0 // pred_region
    %vm19 = vcmask 261120
    %20 = vst.msk [vmem:[#allocation2] sm:$0xff] %vm19, 0.0
    %21 = vst.msk [vmem:[#allocation2 + $0x8] sm:$0xff] %vm19, 0.0
  $region17: #{_lambda_.10} parent=0 // pred_fallthru
    _
  %v22 = vld [vmem:[#allocation2] sm:$0xff]
  %v23 = vld [vmem:[#allocation2 + $0x8] sm:$0xff]
  %v24 = vld [vmem:[%s0] sm:$0xf]
  %v25 = vld [vmem:[%s0 + $0x4] sm:$0xf]
  %v26 = vld [vmem:[%s1] sm:$0xf]
  %v27 = vld [vmem:[%s1 + $0x4] sm:$0xf]
  %v28 = vld [vmem:[%s1 + $0x8] sm:$0xf]
  %v29 = vld [vmem:[%s1 + $0xc] sm:$0xf]
  %v32 = vunpack.c.l.b16 %v24
  %v33 = vunpack.c.l.b16 %v25
  %v34 = vpack.c.b16 %v33, %v32
  %v39 = vunpack.c.l.b16 %v26
  %v40 = vunpack.c.l.b16 %v27
  %v41 = vunpack.c.l.b16 %v28
  %v42 = vunpack.c.l.b16 %v29
  %v43 = vpack.c.b16 %v40, %v39
  %v44 = vpack.c.b16 %v42, %v41
  %vm47 = vcmask 261120
  %v49 = vsel %vm47, %v34, 0
  %51 = vmatprep.subr.bf16.mxu0 0
  %52 = vmatpush1.bf16.msra.mxu0 0
  %53 = vmatprep.subr.bf16.mxu0 0
  %54 = vmatpush1.bf16.msra.mxu0 0
  %55 = vmatprep.subr.bf16.mxu0 0
  %56 = vmatpush1.bf16.msra.mxu0 0
  %57 = vmatprep.subr.bf16.mxu0 0
  %58 = vmatpush1.bf16.msra.mxu0 0
  %59 = vmatprep.subr.bf16.mxu0 0
  %60 = vmatpush1.bf16.msra.mxu0 0
  %61 = vmatprep.subr.bf16.mxu0 0
  %62 = vmatpush1.bf16.msra.mxu0 0
  %63 = vmatprep.subr.bf16.mxu0 0
  %64 = vmatpush1.bf16.msra.mxu0 %v44
  %65 = vmatprep.subr.bf16.mxu0 0
  %66 = vmatpush1.bf16.msra.mxu0 %v43
  %67 = vmatprep.subr.bf16.mxu0 0
  %68 = vmatpush2.bf16.msra.mxu0 0
  %69 = vmatprep.subr.bf16.mxu0 0
  %70 = vmatpush2.bf16.msra.mxu0 0
  %71 = vmatprep.subr.bf16.mxu0 0
  %72 = vmatpush2.bf16.msra.mxu0 0
  %73 = vmatprep.subr.bf16.mxu0 0
  %74 = vmatpush2.bf16.msra.mxu0 0
  %75 = vmatprep.subr.bf16.mxu0 0
  %76 = vmatpush2.bf16.msra.mxu0 0
  %77 = vmatprep.subr.bf16.mxu0 0
  %78 = vmatpush2.bf16.msra.mxu0 0
  %79 = vmatprep.subr.bf16.mxu0 0
  %80 = vmatpush2.bf16.msra.mxu0 0
  %81 = vmatprep.subr.bf16.mxu0 0
  %82 = vmatpush2.bf16.msra.mxu0 0
  %83 = vmatprep.mubr.bf16.mxu0 0
  %84 = vmatmul.mubr.bf16.gmra.mxu0 %v49
  %v85 = vpop.f32.mrf.mxu0
  %v86 = vadd.f32 0.0, %v85
  %v87 = vpop.f32.mrf.mxu0
  %v88 = vpop.f32.mrf.mxu0
  %v89 = vadd.f32 0.0, %v88
  %v90 = vpop.f32.mrf.mxu0
  %91 = vdwg.mxu0
  %v92 = vadd.f32 %v22, %v86
  %v93 = vadd.f32 %v23, %v89
  %94 = vst.msk [vmem:[#allocation2] sm:$0xff] %vm47, %v92
  %95 = vst.msk [vmem:[#allocation2 + $0x8] sm:$0xff] %vm47, %v93
  // Predicated region
  $region18: #{_lambda_.10} parent=0 // pred_check
    %p96 = pneg %p15
  $region19: #{_lambda_.10} parent=0 // pred_check_branch
    %98 = sbr.rel (%p96) target = $region21
  $region20: #{_lambda_.10} parent=0 // pred_region
    %v99 = vld [vmem:[#allocation2] sm:$0xff]
    %v100 = vld [vmem:[#allocation2 + $0x8] sm:$0xff]
    %v101 = vld [vmem:[%s2] sm:$0xff]
    %v102 = vld [vmem:[%s2 + $0x8] sm:$0xff]
    %v103 = vadd.f32 %v99, %v101
    %v104 = vadd.f32 %v100, %v102
    %105 = vst.msk [vmem:[%s3] sm:$0xff] %vm47, %v103
    %106 = vst.msk [vmem:[%s3 + $0x8] sm:$0xff] %vm47, %v104
  $region21: #{_lambda_.10} parent=0 // pred_fallthru
    _
  // Predicated region
  $region22: #{_lambda_.10} parent=0 // pred_check
    _
  $region23: #{_lambda_.10} parent=0 // pred_check_branch
    %108 = sbr.rel (0) target = $region25
  $region24: #{_lambda_.10} parent=0 // pred_region
    _
  $region25: #{_lambda_.10} parent=0 // pred_fallthru
    _
  // Predicated region
  $region26: #{_lambda_.10} parent=0 // pred_check
    _
  $region27: #{_lambda_.10} parent=0 // pred_check_branch
    %110 = sbr.rel (0) target = $region29
  $region28: #{_lambda_.10} parent=0 // pred_region
    _
  $region29: #{_lambda_.10} parent=0 // pred_fallthru
    _

// kernel: _lambda_.9
$region0: #{_lambda_.9}
  #allocation0 [shape = 'u32[]', space=smem, size = 0x4, offset = 0x4, fixed_abs, tag = 'smem constant byte address 0x4 - core index']
  #allocation1 [shape = 'u32[144,128]{1,0:T(1,128)}', space=vmem, size = 0x12000, scoped, tag = 'internal scratch']
  #allocation2 [shape = 'f32[8,1]{1,0:T(8,128)}', space=vmem, size = 0x1000, scoped, tag = 'scratch operand']
  #allocation3 [shape = 'f32[8,1]{1,0:T(8,128)}', space=vmem, size = 0x1000, scoped, tag = 'scratch operand']
  #allocation4 [shape = 'f32[8,8]{1,0:T(8,128)}', space=vmem, size = 0x1000, scoped, tag = 'scratch operand']
  %s0 = inlined_call_operand.vmem [shape: bf16[2,4,8,8], index: 0, kind: input, shape index: {}]
  %s1 = inlined_call_operand.vmem [shape: bf16[2,4,16,8], index: 1, kind: input, shape index: {}]
  %s2 = inlined_call_operand.vmem [shape: bf16[2,4,16,8], index: 2, kind: input, shape index: {}]
  %s3 = inlined_call_operand.vmem [shape: f32[8,8], index: 3, kind: input, shape index: {}]
  %s4 = inlined_call_operand.vmem [shape: f32[8,8], index: 4, kind: input, shape index: {}]
  %s5 = inlined_call_operand.vmem [shape: f32[16,8], index: 5, kind: input, shape index: {}]
  %s6 = inlined_call_operand.vmem [shape: f32[16,8], index: 6, kind: input, shape index: {}]
  %s7 = inlined_call_operand.vmem [shape: bf16[2,4,8,8], index: 7, kind: output, shape index: {}]
  %s8 = sld [smem:[#allocation0]]
  $region69: #{_lambda_.9} parent=0
    _
  %s10 = ssub.s32 1, %s8
  %s11 = scalar_select 0, %s10, %s8
  loop: start=0, step=1, limit=10
  $region2: #{_lambda_.9} parent=0 // loop_pre_header
    _
  $region3: #{_lambda_.9} parent=0 // loop_header
    %s13 = sphi 0, %s17
    %p14 = scmp.ge.s32.totalorder %s13, 10
    %s20 = sphi 0, %s46
    %s21 = sphi 0, %s42
    %s22 = sphi 0, %s38
    %s23 = sphi 0, %s34
    %s24 = sphi 0, %s20
    %s25 = sphi 0, %s21
    %s26 = sphi 0, %s22
    %s27 = sphi 0, %s23
    %s28 = sphi 0, %s24
    %s29 = sphi 0, %s25
    %s30 = sphi 0, %s26
    %s31 = sphi 0, %s27
    %s53 = sphi 0, %s55
    %s56 = sphi 0, %s53
    %s57 = sphi 0, %s56
    %s73 = sphi 0, %s57
    %s83 = sphi 0, %s85
    %s86 = sphi 0, %s83
    %s87 = sphi 0, %s86
    %s103 = sphi 0, %s87
    %s113 = sphi 0, %s115
    %s116 = sphi 0, %s113
    %s117 = sphi 0, %s116
    %s133 = sphi 0, %s117
    %s139 = sphi 0, %s141
    %s142 = sphi 0, %s139
    %s143 = sphi 0, %s142
    %s159 = sphi 0, %s143
    %s165 = sphi 0, %s167
    %s168 = sphi 0, %s165
    %s169 = sphi 0, %s168
    %s185 = sphi 0, %s169
    %s191 = sphi 0, %s193
    %s194 = sphi 0, %s191
    %s195 = sphi 0, %s194
    %s211 = sphi 0, %s195
    %s217 = sphi 0, %s219
    %s220 = sphi 0, %s217
    %s221 = sphi 0, %s220
    %s237 = sphi 0, %s221
    %s247 = sphi 0, %s249
    %s250 = sphi 0, %s247
    %s251 = sphi 0, %s250
    %s267 = sphi 0, %s251
  $region4: #{_lambda_.9} parent=0 // loop_header_branch
    %16 = sbr.rel (%p14) target = $region8
  $region5: #{_lambda_.9} parent=0 // loop_body
    %s18 = ssub.s32 %s13, 1
    %s19 = ssub.s32 %s13, 2
    %s32 = sadd.s32 1, %s23
    %p33 = scmp.ge.s32.totalorder %s32, 1
    %s34 = scalar_select %p33, 0, %s32
    %s35 = sadd.s32 1, %s22
    %s36 = scalar_select %p33, %s35, %s22
    %p37 = scmp.ge.s32.totalorder %s36, 1
    %s38 = scalar_select %p37, 0, %s36
    %s39 = sadd.s32 1, %s21
    %s40 = scalar_select %p37, %s39, %s21
    %p41 = scmp.ge.s32.totalorder %s40, 4
    %s42 = scalar_select %p41, 0, %s40
    %s43 = sadd.s32 1, %s20
    %s44 = scalar_select %p41, %s43, %s20
    %p45 = scmp.ge.s32.totalorder %s44, 2
    %s46 = scalar_select %p45, 0, %s44
    %s47 = ssub.s32 %s20, %s46
    %s48 = ssub.s32 %s21, %s42
    %s49 = sor.u32 %s47, %s48
    %s50 = ssub.s32 %s22, %s38
    %s51 = sor.u32 %s49, %s50
    %p52 = scmp.eq.s32.totalorder %s51, 0
    %s54 = sadd.s32 %s53, 1
    %s55 = scalar_select %p52, %s53, %s54
    %p58 = pneg %p52
    %p59 = scmp.eq.s32.totalorder %s13, 7
    %p60 = por %p58, %p59
    %p61 = scmp.ne.s32.totalorder %s53, %s56
    %p62 = scmp.eq.s32.totalorder %s13, 0
    %p63 = por %p61, %p62
    %p64 = scmp.ne.s32.totalorder %s53, %s56
    %p65 = scmp.eq.s32.totalorder %s18, 7
    %p66 = por %p64, %p65
    %p67 = scmp.ne.s32.totalorder %s56, %s57
    %p68 = scmp.eq.s32.totalorder %s18, 0
    %p69 = por %p67, %p68
    %p70 = scmp.ne.s32.totalorder %s56, %s57
    %p71 = scmp.eq.s32.totalorder %s19, 7
    %p72 = por %p70, %p71
    %p74 = scmp.ne.s32.totalorder %s57, %s73
    %p75 = scmp.eq.s32.totalorder %s19, 0
    %p76 = por %p74, %p75
    %s77 = ssub.s32 %s20, %s46
    %s78 = ssub.s32 %s21, %s42
    %s79 = sor.u32 %s77, %s78
    %s80 = ssub.s32 %s23, %s34
    %s81 = sor.u32 %s79, %s80
    %p82 = scmp.eq.s32.totalorder %s81, 0
    %s84 = sadd.s32 %s83, 1
    %s85 = scalar_select %p82, %s83, %s84
    %p88 = pneg %p82
    %p89 = scmp.eq.s32.totalorder %s13, 7
    %p90 = por %p88, %p89
    %p91 = scmp.ne.s32.totalorder %s83, %s86
    %p92 = scmp.eq.s32.totalorder %s13, 0
    %p93 = por %p91, %p92
    %p94 = scmp.ne.s32.totalorder %s83, %s86
    %p95 = scmp.eq.s32.totalorder %s18, 7
    %p96 = por %p94, %p95
    %p97 = scmp.ne.s32.totalorder %s86, %s87
    %p98 = scmp.eq.s32.totalorder %s18, 0
    %p99 = por %p97, %p98
    %p100 = scmp.ne.s32.totalorder %s86, %s87
    %p101 = scmp.eq.s32.totalorder %s19, 7
    %p102 = por %p100, %p101
    %p104 = scmp.ne.s32.totalorder %s87, %s103
    %p105 = scmp.eq.s32.totalorder %s19, 0
    %p106 = por %p104, %p105
    %s107 = ssub.s32 %s20, %s46
    %s108 = ssub.s32 %s21, %s42
    %s109 = sor.u32 %s107, %s108
    %s110 = ssub.s32 %s23, %s34
    %s111 = sor.u32 %s109, %s110
    %p112 = scmp.eq.s32.totalorder %s111, 0
    %s114 = sadd.s32 %s113, 1
    %s115 = scalar_select %p112, %s113, %s114
    %p118 = pneg %p112
    %p119 = scmp.eq.s32.totalorder %s13, 7
    %p120 = por %p118, %p119
    %p121 = scmp.ne.s32.totalorder %s113, %s116
    %p122 = scmp.eq.s32.totalorder %s13, 0
    %p123 = por %p121, %p122
    %p124 = scmp.ne.s32.totalorder %s113, %s116
    %p125 = scmp.eq.s32.totalorder %s18, 7
    %p126 = por %p124, %p125
    %p127 = scmp.ne.s32.totalorder %s116, %s117
    %p128 = scmp.eq.s32.totalorder %s18, 0
    %p129 = por %p127, %p128
    %p130 = scmp.ne.s32.totalorder %s116, %s117
    %p131 = scmp.eq.s32.totalorder %s19, 7
    %p132 = por %p130, %p131
    %p134 = scmp.ne.s32.totalorder %s117, %s133
    %p135 = scmp.eq.s32.totalorder %s19, 0
    %p136 = por %p134, %p135
    %s137 = ssub.s32 %s22, %s38
    %p138 = scmp.eq.s32.totalorder %s137, 0
    %s140 = sadd.s32 %s139, 1
    %s141 = scalar_select %p138, %s139, %s140
    %p144 = pneg %p138
    %p145 = scmp.eq.s32.totalorder %s13, 7
    %p146 = por %p144, %p145
    %p147 = scmp.ne.s32.totalorder %s139, %s142
    %p148 = scmp.eq.s32.totalorder %s13, 0
    %p149 = por %p147, %p148
    %p150 = scmp.ne.s32.totalorder %s139, %s142
    %p151 = scmp.eq.s32.totalorder %s18, 7
    %p152 = por %p150, %p151
    %p153 = scmp.ne.s32.totalorder %s142, %s143
    %p154 = scmp.eq.s32.totalorder %s18, 0
    %p155 = por %p153, %p154
    %p156 = scmp.ne.s32.totalorder %s142, %s143
    %p157 = scmp.eq.s32.totalorder %s19, 7
    %p158 = por %p156, %p157
    %p160 = scmp.ne.s32.totalorder %s143, %s159
    %p161 = scmp.eq.s32.totalorder %s19, 0
    %p162 = por %p160, %p161
    %s163 = ssub.s32 %s22, %s38
    %p164 = scmp.eq.s32.totalorder %s163, 0
    %s166 = sadd.s32 %s165, 1
    %s167 = scalar_select %p164, %s165, %s166
    %p170 = pneg %p164
    %p171 = scmp.eq.s32.totalorder %s13, 7
    %p172 = por %p170, %p171
    %p173 = scmp.ne.s32.totalorder %s165, %s168
    %p174 = scmp.eq.s32.totalorder %s13, 0
    %p175 = por %p173, %p174
    %p176 = scmp.ne.s32.totalorder %s165, %s168
    %p177 = scmp.eq.s32.totalorder %s18, 7
    %p178 = por %p176, %p177
    %p179 = scmp.ne.s32.totalorder %s168, %s169
    %p180 = scmp.eq.s32.totalorder %s18, 0
    %p181 = por %p179, %p180
    %p182 = scmp.ne.s32.totalorder %s168, %s169
    %p183 = scmp.eq.s32.totalorder %s19, 7
    %p184 = por %p182, %p183
    %p186 = scmp.ne.s32.totalorder %s169, %s185
    %p187 = scmp.eq.s32.totalorder %s19, 0
    %p188 = por %p186, %p187
    %s189 = ssub.s32 %s23, %s34
    %p190 = scmp.eq.s32.totalorder %s189, 0
    %s192 = sadd.s32 %s191, 1
    %s193 = scalar_select %p190, %s191, %s192
    %p196 = pneg %p190
    %p197 = scmp.eq.s32.totalorder %s13, 7
    %p198 = por %p196, %p197
    %p199 = scmp.ne.s32.totalorder %s191, %s194
    %p200 = scmp.eq.s32.totalorder %s13, 0
    %p201 = por %p199, %p200
    %p202 = scmp.ne.s32.totalorder %s191, %s194
    %p203 = scmp.eq.s32.totalorder %s18, 7
    %p204 = por %p202, %p203
    %p205 = scmp.ne.s32.totalorder %s194, %s195
    %p206 = scmp.eq.s32.totalorder %s18, 0
    %p207 = por %p205, %p206
    %p208 = scmp.ne.s32.totalorder %s194, %s195
    %p209 = scmp.eq.s32.totalorder %s19, 7
    %p210 = por %p208, %p209
    %p212 = scmp.ne.s32.totalorder %s195, %s211
    %p213 = scmp.eq.s32.totalorder %s19, 0
    %p214 = por %p212, %p213
    %s215 = ssub.s32 %s23, %s34
    %p216 = scmp.eq.s32.totalorder %s215, 0
    %s218 = sadd.s32 %s217, 1
    %s219 = scalar_select %p216, %s217, %s218
    %p222 = pneg %p216
    %p223 = scmp.eq.s32.totalorder %s13, 7
    %p224 = por %p222, %p223
    %p225 = scmp.ne.s32.totalorder %s217, %s220
    %p226 = scmp.eq.s32.totalorder %s13, 0
    %p227 = por %p225, %p226
    %p228 = scmp.ne.s32.totalorder %s217, %s220
    %p229 = scmp.eq.s32.totalorder %s18, 7
    %p230 = por %p228, %p229
    %p231 = scmp.ne.s32.totalorder %s220, %s221
    %p232 = scmp.eq.s32.totalorder %s18, 0
    %p233 = por %p231, %p232
    %p234 = scmp.ne.s32.totalorder %s220, %s221
    %p235 = scmp.eq.s32.totalorder %s19, 7
    %p236 = por %p234, %p235
    %p238 = scmp.ne.s32.totalorder %s221, %s237
    %p239 = scmp.eq.s32.totalorder %s19, 0
    %p240 = por %p238, %p239
    %s241 = ssub.s32 %s20, %s46
    %s242 = ssub.s32 %s21, %s42
    %s243 = sor.u32 %s241, %s242
    %s244 = ssub.s32 %s22, %s38
    %s245 = sor.u32 %s243, %s244
    %p246 = scmp.eq.s32.totalorder %s245, 0
    %s248 = sadd.s32 %s247, 1
    %s249 = scalar_select %p246, %s247, %s248
    %p252 = pneg %p246
    %p253 = scmp.eq.s32.totalorder %s13, 7
    %p254 = por %p252, %p253
    %p255 = scmp.ne.s32.totalorder %s247, %s250
    %p256 = scmp.eq.s32.totalorder %s13, 0
    %p257 = por %p255, %p256
    %p258 = scmp.ne.s32.totalorder %s247, %s250
    %p259 = scmp.eq.s32.totalorder %s18, 7
    %p260 = por %p258, %p259
    %p261 = scmp.ne.s32.totalorder %s250, %s251
    %p262 = scmp.eq.s32.totalorder %s18, 0
    %p263 = por %p261, %p262
    %p264 = scmp.ne.s32.totalorder %s250, %s251
    %p265 = scmp.eq.s32.totalorder %s19, 7
    %p266 = por %p264, %p265
    %p268 = scmp.ne.s32.totalorder %s251, %s267
    %p269 = scmp.eq.s32.totalorder %s19, 0
    %p270 = por %p268, %p269
    %p271 = scmp.le.s32.totalorder 1, %s13
    %p272 = scmp.lt.s32.totalorder %s13, 9
    %p273 = pnand %p271, %p272
    %p274 = pneg %p273
    // Predicated region
    $region9: #{_lambda_.9} parent=5 // pred_check
      _
    $region10: #{_lambda_.9} parent=5 // pred_check_branch
      %276 = sbr.rel (%p273) target = $region12
    $region11: #{_lambda_.9} parent=5 // pred_region
      %s277 = ssub.s32 %s13, 1
      // Predicated region
      $region13: #{_lambda_.9} parent=11 // pred_check
        %p278 = pneg %p155
      $region14: #{_lambda_.9} parent=11 // pred_check_branch
        %280 = sbr.rel (%p278) target = $region16
      $region15: #{_lambda_.9} parent=11 // pred_region
        %p281 = scmp.lt.s32.totalorder %s26, 0
        %s282 = scalar_select %p281, %s26, 0
        %s283 = smul.addr %s282, 8
        %s284 = scalar_lea.vmem %s3, %s283
      $region16: #{_lambda_.9} parent=11 // pred_fallthru
        _
      // Predicated region
      $region17: #{_lambda_.9} parent=11 // pred_check
        %p285 = pneg %p181
      $region18: #{_lambda_.9} parent=11 // pred_check_branch
        %287 = sbr.rel (%p285) target = $region20
      $region19: #{_lambda_.9} parent=11 // pred_region
        %p288 = scmp.lt.s32.totalorder %s26, 0
        %s289 = scalar_select %p288, %s26, 0
        %s290 = smul.addr %s289, 8
        %s291 = scalar_lea.vmem %s4, %s290
      $region20: #{_lambda_.9} parent=11 // pred_fallthru
        _
      // Predicated region
      $region21: #{_lambda_.9} parent=11 // pred_check
        %p292 = pneg %p207
      $region22: #{_lambda_.9} parent=11 // pred_check_branch
        %294 = sbr.rel (%p292) target = $region24
      $region23: #{_lambda_.9} parent=11 // pred_region
        %s295 = smul.u32 2, %s27
        %p296 = scmp.lt.s32.totalorder %s295, 1
        %s297 = scalar_select %p296, %s295, 1
        %s298 = smul.addr %s297, 8
        %s299 = scalar_lea.vmem %s5, %s298
        %s300 = smul.u32 2, %s27
      $region24: #{_lambda_.9} parent=11 // pred_fallthru
        _
      // Predicated region
      $region25: #{_lambda_.9} parent=11 // pred_check
        %p301 = pneg %p233
      $region26: #{_lambda_.9} parent=11 // pred_check_branch
        %303 = sbr.rel (%p301) target = $region28
      $region27: #{_lambda_.9} parent=11 // pred_region
        %s304 = smul.u32 2, %s27
        %p305 = scmp.lt.s32.totalorder %s304, 1
        %s306 = scalar_select %p305, %s304, 1
        %s307 = smul.addr %s306, 8
        %s308 = scalar_lea.vmem %s6, %s307
        %s309 = smul.u32 2, %s27
      $region28: #{_lambda_.9} parent=11 // pred_fallthru
        _
    $region12: #{_lambda_.9} parent=5 // pred_fallthru
      _
    %p310 = scmp.lt.s32.totalorder %s13, 8
    // Predicated region
    $region29: #{_lambda_.9} parent=5 // pred_check
      %p311 = pneg %p310
    $region30: #{_lambda_.9} parent=5 // pred_check_branch
      %313 = sbr.rel (%p311) target = $region32
    $region31: #{_lambda_.9} parent=5 // pred_region
      // Predicated region
      $region33: #{_lambda_.9} parent=31 // pred_check
        %p314 = pneg %p63
      $region34: #{_lambda_.9} parent=31 // pred_check_branch
        %316 = sbr.rel (%p314) target = $region36
      $region35: #{_lambda_.9} parent=31 // pred_region
        %p317 = scmp.lt.s32.totalorder %s20, 1
        %s318 = scalar_select %p317, %s20, 1
        %p319 = scmp.lt.s32.totalorder %s21, 3
        %s320 = scalar_select %p319, %s21, 3
        %p321 = scmp.lt.s32.totalorder %s22, 0
        %s322 = scalar_select %p321, %s22, 0
        %s323 = sadd.s32 %s322, %s320
        %s324 = smul.addr %s318, 4
        %s325 = sadd.s32 %s323, %s324
        %s326 = smul.addr %s325, 4
        %s327 = scalar_lea.vmem %s0, %s326
      $region36: #{_lambda_.9} parent=31 // pred_fallthru
        _
      // Predicated region
      $region37: #{_lambda_.9} parent=31 // pred_check
        %p328 = pneg %p93
      $region38: #{_lambda_.9} parent=31 // pred_check_branch
        %330 = sbr.rel (%p328) target = $region40
      $region39: #{_lambda_.9} parent=31 // pred_region
        %s331 = smul.u32 2, %s23
        %p332 = scmp.lt.s32.totalorder %s20, 1
        %s333 = scalar_select %p332, %s20, 1
        %p334 = scmp.lt.s32.totalorder %s21, 3
        %s335 = scalar_select %p334, %s21, 3
        %p336 = scmp.lt.s32.totalorder %s331, 1
        %s337 = scalar_select %p336, %s331, 1
        %s338 = smul.addr %s335, 2
        %s339 = sadd.s32 %s337, %s338
        %s340 = smul.addr %s333, 8
        %s341 = sadd.s32 %s339, %s340
        %s342 = smul.addr %s341, 4
        %s343 = scalar_lea.vmem %s1, %s342
        %s344 = smul.u32 2, %s23
      $region40: #{_lambda_.9} parent=31 // pred_fallthru
        _
      // Predicated region
      $region41: #{_lambda_.9} parent=31 // pred_check
        %p345 = pneg %p123
      $region42: #{_lambda_.9} parent=31 // pred_check_branch
        %347 = sbr.rel (%p345) target = $region44
      $region43: #{_lambda_.9} parent=31 // pred_region
        %s348 = smul.u32 2, %s23
        %p349 = scmp.lt.s32.totalorder %s20, 1
        %s350 = scalar_select %p349, %s20, 1
        %p351 = scmp.lt.s32.totalorder %s21, 3
        %s352 = scalar_select %p351, %s21, 3
        %p353 = scmp.lt.s32.totalorder %s348, 1
        %s354 = scalar_select %p353, %s348, 1
        %s355 = smul.addr %s352, 2
        %s356 = sadd.s32 %s354, %s355
        %s357 = smul.addr %s350, 8
        %s358 = sadd.s32 %s356, %s357
        %s359 = smul.addr %s358, 4
        %s360 = scalar_lea.vmem %s2, %s359
        %s361 = smul.u32 2, %s23
      $region44: #{_lambda_.9} parent=31 // pred_fallthru
        _
    $region32: #{_lambda_.9} parent=5 // pred_fallthru
      _
    %p362 = scmp.le.s32.totalorder 1, %s13
    %p363 = scmp.lt.s32.totalorder %s13, 9
    %p364 = pnand %p362, %p363
    %p365 = pneg %p364
    // Predicated region
    $region45: #{_lambda_.9} parent=5 // pred_check
      _
    $region46: #{_lambda_.9} parent=5 // pred_check_branch
      %367 = sbr.rel (%p364) target = $region48
    $region47: #{_lambda_.9} parent=5 // pred_region
      %s368 = ssub.s32 %s13, 1
      %p369 = scmp.lt.s32.totalorder %s24, 1
      %s370 = scalar_select %p369, %s24, 1
      %p371 = scmp.lt.s32.totalorder %s25, 3
      %s372 = scalar_select %p371, %s25, 3
      %p373 = scmp.lt.s32.totalorder %s26, 0
      %s374 = scalar_select %p373, %s26, 0
      %s375 = sadd.s32 %s374, %s372
      %s376 = smul.addr %s370, 4
      %s377 = sadd.s32 %s375, %s376
      %s378 = smul.addr %s377, 4
      %s379 = scalar_lea.vmem %s0, %s378
      %p380 = pneg %p69
      %p381 = pneg %p66
      %s382 = smul.u32 2, %s27
      %p383 = scmp.lt.s32.totalorder %s24, 1
      %s384 = scalar_select %p383, %s24, 1
      %p385 = scmp.lt.s32.totalorder %s25, 3
      %s386 = scalar_select %p385, %s25, 3
      %p387 = scmp.lt.s32.totalorder %s382, 1
      %s388 = scalar_select %p387, %s382, 1
      %s389 = smul.addr %s386, 2
      %s390 = sadd.s32 %s388, %s389
      %s391 = smul.addr %s384, 8
      %s392 = sadd.s32 %s390, %s391
      %s393 = smul.addr %s392, 4
      %s394 = scalar_lea.vmem %s1, %s393
      %p395 = pneg %p99
      %p396 = pneg %p96
      %s397 = smul.u32 2, %s27
      %p398 = scmp.lt.s32.totalorder %s24, 1
      %s399 = scalar_select %p398, %s24, 1
      %p400 = scmp.lt.s32.totalorder %s25, 3
      %s401 = scalar_select %p400, %s25, 3
      %p402 = scmp.lt.s32.totalorder %s397, 1
      %s403 = scalar_select %p402, %s397, 1
      %s404 = smul.addr %s401, 2
      %s405 = sadd.s32 %s403, %s404
      %s406 = smul.addr %s399, 8
      %s407 = sadd.s32 %s405, %s406
      %s408 = smul.addr %s407, 4
      %s409 = scalar_lea.vmem %s2, %s408
      %p410 = pneg %p129
      %p411 = pneg %p126
      %p412 = scmp.lt.s32.totalorder %s26, 0
      %s413 = scalar_select %p412, %s26, 0
      %s414 = smul.addr %s413, 8
      %s415 = scalar_lea.vmem %s3, %s414
      %p416 = pneg %p155
      %p417 = pneg %p152
      %p418 = scmp.lt.s32.totalorder %s26, 0
      %s419 = scalar_select %p418, %s26, 0
      %s420 = smul.addr %s419, 8
      %s421 = scalar_lea.vmem %s4, %s420
      %p422 = pneg %p181
      %p423 = pneg %p178
      %s424 = smul.u32 2, %s27
      %p425 = scmp.lt.s32.totalorder %s424, 1
      %s426 = scalar_select %p425, %s424, 1
      %s427 = smul.addr %s426, 8
      %s428 = scalar_lea.vmem %s5, %s427
      %p429 = pneg %p207
      %p430 = pneg %p204
      %s431 = smul.u32 2, %s27
      %p432 = scmp.lt.s32.totalorder %s431, 1
      %s433 = scalar_select %p432, %s431, 1
      %s434 = smul.addr %s433, 8
      %s435 = scalar_lea.vmem %s6, %s434
      %p436 = pneg %p233
      %p437 = pneg %p230
      %p438 = pneg %p263
      %p439 = pneg %p260
      %p440 = scmp.lt.s32.totalorder %s24, 1
      %s441 = scalar_select %p440, %s24, 1
      %p442 = scmp.lt.s32.totalorder %s25, 3
      %s443 = scalar_select %p442, %s25, 3
      %p444 = scmp.lt.s32.totalorder %s26, 0
      %s445 = scalar_select %p444, %s26, 0
      %s446 = sadd.s32 %s445, %s443
      %s447 = smul.addr %s441, 4
      %s448 = sadd.s32 %s446, %s447
      %s449 = smul.addr %s448, 4
      %s450 = scalar_lea.vmem %s7, %s449
      %p451 = scmp.lt.s32.totalorder %s24, 1
      %s452 = scalar_select %p451, %s24, 1
      %p453 = scmp.lt.s32.totalorder %s25, 3
      %s454 = scalar_select %p453, %s25, 3
      %p455 = scmp.lt.s32.totalorder %s26, 0
      %s456 = scalar_select %p455, %s26, 0
      %s457 = sadd.s32 %s456, %s454
      %s458 = smul.addr %s452, 4
      %s459 = sadd.s32 %s457, %s458
      %s460 = smul.addr %s459, 4
      %s461 = scalar_lea.vmem %s0, %s460
      %s462 = smul.u32 2, %s27
      %p463 = scmp.lt.s32.totalorder %s24, 1
      %s464 = scalar_select %p463, %s24, 1
      %p465 = scmp.lt.s32.totalorder %s25, 3
      %s466 = scalar_select %p465, %s25, 3
      %p467 = scmp.lt.s32.totalorder %s462, 1
      %s468 = scalar_select %p467, %s462, 1
      %s469 = smul.addr %s466, 2
      %s470 = sadd.s32 %s468, %s469
      %s471 = smul.addr %s464, 8
      %s472 = sadd.s32 %s470, %s471
      %s473 = smul.addr %s472, 4
      %s474 = scalar_lea.vmem %s1, %s473
      %s475 = smul.u32 2, %s27
      %s476 = smul.u32 2, %s27
      %p477 = scmp.lt.s32.totalorder %s24, 1
      %s478 = scalar_select %p477, %s24, 1
      %p479 = scmp.lt.s32.totalorder %s25, 3
      %s480 = scalar_select %p479, %s25, 3
      %p481 = scmp.lt.s32.totalorder %s476, 1
      %s482 = scalar_select %p481, %s476, 1
      %s483 = smul.addr %s480, 2
      %s484 = sadd.s32 %s482, %s483
      %s485 = smul.addr %s478, 8
      %s486 = sadd.s32 %s484, %s485
      %s487 = smul.addr %s486, 4
      %s488 = scalar_lea.vmem %s2, %s487
      %s489 = smul.u32 2, %s27
      %p490 = scmp.lt.s32.totalorder %s26, 0
      %s491 = scalar_select %p490, %s26, 0
      %s492 = smul.addr %s491, 8
      %s493 = scalar_lea.vmem %s3, %s492
      %p494 = scmp.lt.s32.totalorder %s26, 0
      %s495 = scalar_select %p494, %s26, 0
      %s496 = smul.addr %s495, 8
      %s497 = scalar_lea.vmem %s4, %s496
      %s498 = smul.u32 2, %s27
      %p499 = scmp.lt.s32.totalorder %s498, 1
      %s500 = scalar_select %p499, %s498, 1
      %s501 = smul.addr %s500, 8
      %s502 = scalar_lea.vmem %s5, %s501
      %s503 = smul.u32 2, %s27
      %s504 = smul.u32 2, %s27
      %p505 = scmp.lt.s32.totalorder %s504, 1
      %s506 = scalar_select %p505, %s504, 1
      %s507 = smul.addr %s506, 8
      %s508 = scalar_lea.vmem %s6, %s507
      %s509 = smul.u32 2, %s27
      %p510 = scmp.lt.s32.totalorder %s24, 1
      %s511 = scalar_select %p510, %s24, 1
      %p512 = scmp.lt.s32.totalorder %s25, 3
      %s513 = scalar_select %p512, %s25, 3
      %p514 = scmp.lt.s32.totalorder %s26, 0
      %s515 = scalar_select %p514, %s26, 0
      %s516 = sadd.s32 %s515, %s513
      %s517 = smul.addr %s511, 4
      %s518 = sadd.s32 %s516, %s517
      %s519 = smul.addr %s518, 4
      %s520 = scalar_lea.vmem %s7, %s519
      %p522 = scmp.eq.s32.totalorder %s27, 0
      // Predicated region
      $region49: #{_lambda_.9} parent=47 // pred_check
        %p523 = pneg %p522
      $region50: #{_lambda_.9} parent=47 // pred_check_branch
        %525 = sbr.rel (%p523) target = $region52
      $region51: #{_lambda_.9} parent=47 // pred_region
        %vm526 = vcmask 7168
        %527 = vst.msk [vmem:[#allocation2] sm:$0xff] %vm526, -1e+30
        %528 = vst.msk [vmem:[#allocation3] sm:$0xff] %vm526, 0.0
        %vm529 = vcmask 64512
        %530 = vst.msk [vmem:[#allocation4] sm:$0xff] %vm529, 0.0
      $region52: #{_lambda_.9} parent=47 // pred_fallthru
        _
      %v531 = vld [vmem:[%s461] sm:$0xf]
      %v532 = vunpack.c.l.bf16 %v531
      %v533 = vld [vmem:[%s493] sm:$0xff]
      %v534 = vld [vmem:[%s497] sm:$0xff]
      %v535 = vsub.f32 0.0, %v532
      %537 = vrot.lane.b32.xlu0 %v535, 124
      %v538 = vpop.permute.xlu0 %537
      %541 = vrot.lane.b32.xlu0 %v532, 4
      %v542 = vpop.permute.xlu0 %541
      %vm544 = vcmask 31744
      %v545 = vsel %vm544, %v538, %v542
      %v546 = vmul.f32 %v532, %v533
      %v547 = vmul.f32 %v545, %v534
      %v548 = vadd.f32 %v546, %v547
      %v549 = vpack.c.bf16 %v548, %v548
      %v550 = vld [vmem:[%s474] sm:$0xf]
      %v551 = vld [vmem:[%s474 + $0x4] sm:$0xf]
      %v552 = vunpack.c.l.bf16 %v550
      %v553 = vunpack.c.l.bf16 %v551
      %v554 = vld [vmem:[%s502] sm:$0xff]
      %v555 = vld [vmem:[%s502 + $0x8] sm:$0xff]
      %v556 = vld [vmem:[%s508] sm:$0xff]
      %v557 = vld [vmem:[%s508 + $0x8] sm:$0xff]
      %v558 = vsub.f32 0.0, %v552
      %v559 = vsub.f32 0.0, %v553
      %562 = vrot.lane.b32.xlu0 %v558, 124
      %v563 = vpop.permute.xlu0 %562
      %564 = vrot.lane.b32.xlu0 %v559, 124
      %v565 = vpop.permute.xlu0 %564
      %570 = vrot.lane.b32.xlu0 %v552, 4
      %v571 = vpop.permute.xlu0 %570
      %572 = vrot.lane.b32.xlu0 %v553, 4
      %v573 = vpop.permute.xlu0 %572
      %v576 = vsel %vm544, %v563, %v571
      %v577 = vsel %vm544, %v565, %v573
      %v578 = vmul.f32 %v552, %v554
      %v579 = vmul.f32 %v553, %v555
      %v580 = vmul.f32 %v576, %v556
      %v581 = vmul.f32 %v577, %v557
      %v582 = vadd.f32 %v578, %v580
      %v583 = vadd.f32 %v579, %v581
      %v584 = vpack.c.bf16 %v583, %v582
      %v585 = vld [vmem:[%s488] sm:$0xf]
      %v586 = vld [vmem:[%s488 + $0x4] sm:$0xf]
      %vm587 = vcmask 64512
      %v589 = vsel %vm587, %v549, 0
      %v592 = vsel %vm587, %v584, 0
      %594 = vmatprep.subr.bf16.mxu0 0
      %595 = vmatpush1.bf16.xpose.msra.mxu0 0
      %596 = vmatprep.subr.bf16.mxu0 0
      %597 = vmatpush1.bf16.xpose.msra.mxu0 0
      %598 = vmatprep.subr.bf16.mxu0 0
      %599 = vmatpush1.bf16.xpose.msra.mxu0 0
      %600 = vmatprep.subr.bf16.mxu0 0
      %601 = vmatpush1.bf16.xpose.msra.mxu0 0
      %602 = vmatprep.subr.bf16.mxu0 0
      %603 = vmatpush1.bf16.xpose.msra.mxu0 0
      %604 = vmatprep.subr.bf16.mxu0 0
      %605 = vmatpush1.bf16.xpose.msra.mxu0 0
      %606 = vmatprep.subr.bf16.mxu0 0
      %607 = vmatpush1.bf16.xpose.msra.mxu0 0
      %608 = vmatprep.subr.bf16.mxu0 0
      %609 = vmatpush1.bf16.xpose.msra.mxu0 %v592
      %610 = vmatprep.subr.bf16.mxu0 0
      %611 = vmatpush2.bf16.xpose.msra.mxu0 0
      %612 = vmatprep.subr.bf16.mxu0 0
      %613 = vmatpush2.bf16.xpose.msra.mxu0 0
      %614 = vmatprep.subr.bf16.mxu0 0
      %615 = vmatpush2.bf16.xpose.msra.mxu0 0
      %616 = vmatprep.subr.bf16.mxu0 0
      %617 = vmatpush2.bf16.xpose.msra.mxu0 0
      %618 = vmatprep.subr.bf16.mxu0 0
      %619 = vmatpush2.bf16.xpose.msra.mxu0 0
      %620 = vmatprep.subr.bf16.mxu0 0
      %621 = vmatpush2.bf16.xpose.msra.mxu0 0
      %622 = vmatprep.subr.bf16.mxu0 0
      %623 = vmatpush2.bf16.xpose.msra.mxu0 0
      %624 = vmatprep.subr.bf16.mxu0 0
      %625 = vmatpush2.bf16.xpose.msra.mxu0 0
      %626 = vmatprep.mubr.bf16.mxu0 0
      %627 = vmatmul.mubr.bf16.gmra.mxu0 %v589
      %v628 = vpop.f32.mrf.mxu0
      %v629 = vadd.f32 0.0, %v628
      %v630 = vpop.f32.mrf.mxu0
      %v631 = vpop.f32.mrf.mxu0
      %v632 = vpop.f32.mrf.mxu0
      %633 = vdwg.mxu0
      %s634 = smul.u32 %s26, 8
      %s635 = sadd.s32 %s634, 8
      %v636 = vlaneseq
      %v637 = vshrl.u32 %v636, 7
      %v638 = vstv %s635
      %v639 = vadd.s32 %v638, %v637
      %s640 = smul.u32 %s27, 16
      %v641 = vlaneseq
      %v642 = vand.u32 %v641, 127
      %v643 = vstv %s640
      %v644 = vadd.s32 %v643, %v642
      %vm645 = vcmp.le.s32.totalorder %v644, %v639
      %v646 = vsel %vm645, %v629, -1e+30
      %v647 = vld [vmem:[#allocation2] sm:$0xff]
      %vm648 = vcmask 130048
      %v649 = vsel %vm648, %v646, -inf
      %650 = vmax.xlane.f32.xlu0 %v649
      %v651 = vpop.xlane.xlu0 %650
      %v652 = vmax.f32 %v647, %v651
      %v653 = vsub.f32 %v647, %v652
      %v654 = vmul.f32 %v653, 1.442695
      %v655 = vpow.pop %v654
      %657 = vset.pattern.permute.xlu0 0
      %658 = vperm.xlu0 %657, %v652
      %v659 = vpop.permute.xlu0 %658
      %v661 = vsub.f32 %v646, %v659
      %v662 = vmul.f32 %v661, 1.442695
      %v663 = vpow.pop %v662
      %v664 = vld [vmem:[#allocation3] sm:$0xff]
      %v665 = vmul.f32 %v655, %v664
      %v666 = vsel %vm648, %v663, 0.0
      %667 = vadd.xlane.f32.xlu0 %v666
      %v668 = vpop.xlane.xlu0 %667
      %v669 = vadd.f32 %v665, %v668
      %vm670 = vcmask 7168
      %671 = vst.msk [vmem:[#allocation3] sm:$0xff] %vm670, %v669
      %v672 = vld [vmem:[#allocation4] sm:$0xff]
      %674 = vset.pattern.permute.xlu0 0
      %675 = vperm.xlu0 %674, %v655
      %v676 = vpop.permute.xlu0 %675
      %v678 = vmul.f32 %v676, %v672
      %v679 = vpack.c.bf16 %v663, %v663
      %v682 = vunpack.c.l.b16 %v585
      %v683 = vunpack.c.l.b16 %v586
      %v684 = vpack.c.b16 %v683, %v682
      %v687 = vsel %vm648, %v679, 0
      %689 = vmatprep.subr.bf16.mxu0 0
      %690 = vmatpush1.bf16.msra.mxu0 0
      %691 = vmatprep.subr.bf16.mxu0 0
      %692 = vmatpush1.bf16.msra.mxu0 0
      %693 = vmatprep.subr.bf16.mxu0 0
      %694 = vmatpush1.bf16.msra.mxu0 0
      %695 = vmatprep.subr.bf16.mxu0 0
      %696 = vmatpush1.bf16.msra.mxu0 0
      %697 = vmatprep.subr.bf16.mxu0 0
      %698 = vmatpush1.bf16.msra.mxu0 0
      %699 = vmatprep.subr.bf16.mxu0 0
      %700 = vmatpush1.bf16.msra.mxu0 0
      %701 = vmatprep.subr.bf16.mxu0 0
      %702 = vmatpush1.bf16.msra.mxu0 0
      %703 = vmatprep.subr.bf16.mxu0 0
      %704 = vmatpush1.bf16.msra.mxu0 %v684
      %705 = vmatprep.subr.bf16.mxu0 0
      %706 = vmatpush2.bf16.msra.mxu0 0
      %707 = vmatprep.subr.bf16.mxu0 0
      %708 = vmatpush2.bf16.msra.mxu0 0
      %709 = vmatprep.subr.bf16.mxu0 0
      %710 = vmatpush2.bf16.msra.mxu0 0
      %711 = vmatprep.subr.bf16.mxu0 0
      %712 = vmatpush2.bf16.msra.mxu0 0
      %713 = vmatprep.subr.bf16.mxu0 0
      %714 = vmatpush2.bf16.msra.mxu0 0
      %715 = vmatprep.subr.bf16.mxu0 0
      %716 = vmatpush2.bf16.msra.mxu0 0
      %717 = vmatprep.subr.bf16.mxu0 0
      %718 = vmatpush2.bf16.msra.mxu0 0
      %719 = vmatprep.subr.bf16.mxu0 0
      %720 = vmatpush2.bf16.msra.mxu0 0
      %721 = vmatprep.mubr.bf16.mxu0 0
      %722 = vmatmul.mubr.bf16.gmra.mxu0 %v687
      %v723 = vpop.f32.mrf.mxu0
      %v724 = vadd.f32 0.0, %v723
      %v725 = vpop.f32.mrf.mxu0
      %v726 = vpop.f32.mrf.mxu0
      %v727 = vpop.f32.mrf.mxu0
      %728 = vdwg.mxu0
      %v729 = vadd.f32 %v678, %v724
      %730 = vst.msk [vmem:[#allocation4] sm:$0xff] %vm587, %v729
      %731 = vst.msk [vmem:[#allocation2] sm:$0xff] %vm670, %v652
      // Predicated region
      $region53: #{_lambda_.9} parent=47 // pred_check
        %p732 = pneg %p522
      $region54: #{_lambda_.9} parent=47 // pred_check_branch
        %734 = sbr.rel (%p732) target = $region56
      $region55: #{_lambda_.9} parent=47 // pred_region
        %v735 = vld [vmem:[#allocation4] sm:$0xff]
        %v736 = vld [vmem:[#allocation3] sm:$0xff]
        %v737 = vrcp.pop %v736
        %739 = vset.pattern.permute.xlu0 0
        %740 = vperm.xlu0 %739, %v737
        %v741 = vpop.permute.xlu0 %740
        %v743 = vmul.f32 %v735, %v741
        %v744 = vpack.c.bf16 %v743, %v743
        %vm745 = vcmask 60416
        %746 = vst.msk [vmem:[%s520] sm:$0xf] %vm745, %v744
      $region56: #{_lambda_.9} parent=47 // pred_fallthru
        _
      %p747 = scmp.lt.s32.totalorder %s24, 1
      %s748 = scalar_select %p747, %s24, 1
      %p749 = scmp.lt.s32.totalorder %s25, 3
      %s750 = scalar_select %p749, %s25, 3
      %p751 = scmp.lt.s32.totalorder %s26, 0
      %s752 = scalar_select %p751, %s26, 0
      %s753 = sadd.s32 %s752, %s750
      %s754 = smul.addr %s748, 4
      %s755 = sadd.s32 %s753, %s754
      %s756 = smul.addr %s755, 4
      %s757 = scalar_lea.vmem %s7, %s756
      // Predicated region
      $region57: #{_lambda_.9} parent=47 // pred_check
        %p758 = pneg %p260
      $region58: #{_lambda_.9} parent=47 // pred_check_branch
        %760 = sbr.rel (%p758) target = $region60
      $region59: #{_lambda_.9} parent=47 // pred_region
        _
      $region60: #{_lambda_.9} parent=47 // pred_fallthru
        _
    $region48: #{_lambda_.9} parent=5 // pred_fallthru
      _
    %p761 = scmp.le.s32.totalorder 2, %s13
    // Predicated region
    $region61: #{_lambda_.9} parent=5 // pred_check
      %p762 = pneg %p761
    $region62: #{_lambda_.9} parent=5 // pred_check_branch
      %764 = sbr.rel (%p762) target = $region64
    $region63: #{_lambda_.9} parent=5 // pred_region
      %s765 = ssub.s32 %s13, 2
      // Predicated region
      $region65: #{_lambda_.9} parent=63 // pred_check
        %p766 = pneg %p266
      $region66: #{_lambda_.9} parent=63 // pred_check_branch
        %768 = sbr.rel (%p766) target = $region68
      $region67: #{_lambda_.9} parent=63 // pred_region
        %p769 = scmp.lt.s32.totalorder %s28, 1
        %s770 = scalar_select %p769, %s28, 1
        %p771 = scmp.lt.s32.totalorder %s29, 3
        %s772 = scalar_select %p771, %s29, 3
        %p773 = scmp.lt.s32.totalorder %s30, 0
        %s774 = scalar_select %p773, %s30, 0
        %s775 = sadd.s32 %s774, %s772
        %s776 = smul.addr %s770, 4
        %s777 = sadd.s32 %s775, %s776
        %s778 = smul.addr %s777, 4
        %s779 = scalar_lea.vmem %s7, %s778
      $region68: #{_lambda_.9} parent=63 // pred_fallthru
        _
    $region64: #{_lambda_.9} parent=5 // pred_fallthru
      _
  $region6: #{_lambda_.9} parent=0 // loop_footer
    %s17 = sadd.s32 1, %s13
  $region7: #{_lambda_.9} parent=0 // loop_footer_branch
    %12 = sbr.rel target = $region3
  $region8: #{_lambda_.9} parent=0 // loop_exit
    _

// kernel: _lambda_.12
$region0: #{_lambda_.12}
  #allocation0 [shape = 'u32[]', space=smem, size = 0x4, offset = 0x4, fixed_abs, tag = 'smem constant byte address 0x4 - core index']
  #allocation1 [shape = 'u32[144,128]{1,0:T(1,128)}', space=vmem, size = 0x12000, scoped, tag = 'internal scratch']
  #allocation2 [shape = 'f32[16,32]{1,0:T(8,128)}', space=vmem, size = 0x2000, scoped, tag = 'scratch operand']
  %s0 = inlined_call_operand.vmem [shape: bf16[16,64], index: 0, kind: input, shape index: {}]
  %s1 = inlined_call_operand.vmem [shape: bf16[64,32], index: 1, kind: input, shape index: {}]
  %s2 = inlined_call_operand.vmem [shape: f32[16,32], index: 2, kind: input, shape index: {}]
  %s3 = inlined_call_operand.vmem [shape: f32[16,32], index: 3, kind: output, shape index: {}]
  %s4 = sld [smem:[#allocation0]]
  $region30: #{_lambda_.12} parent=0
    _
  %s6 = ssub.s32 1, %s4
  %s7 = scalar_select 0, %s6, %s4
  // Predicated region
  $region2: #{_lambda_.12} parent=0 // pred_check
    _
  $region3: #{_lambda_.12} parent=0 // pred_check_branch
    %9 = sbr.rel (0) target = $region5
  $region4: #{_lambda_.12} parent=0 // pred_region
    _
  $region5: #{_lambda_.12} parent=0 // pred_fallthru
    _
  // Predicated region
  $region6: #{_lambda_.12} parent=0 // pred_check
    _
  $region7: #{_lambda_.12} parent=0 // pred_check_branch
    %11 = sbr.rel (0) target = $region9
  $region8: #{_lambda_.12} parent=0 // pred_region
    _
  $region9: #{_lambda_.12} parent=0 // pred_fallthru
    _
  // Predicated region
  $region10: #{_lambda_.12} parent=0 // pred_check
    _
  $region11: #{_lambda_.12} parent=0 // pred_check_branch
    %13 = sbr.rel (0) target = $region13
  $region12: #{_lambda_.12} parent=0 // pred_region
    _
  $region13: #{_lambda_.12} parent=0 // pred_fallthru
    _
  %p15 = scmp.eq.s32.totalorder 0, 0
  // Predicated region
  $region14: #{_lambda_.12} parent=0 // pred_check
    %p16 = pneg %p15
  $region15: #{_lambda_.12} parent=0 // pred_check_branch
    %18 = sbr.rel (%p16) target = $region17
  $region16: #{_lambda_.12} parent=0 // pred_region
    %vm19 = vcmask 261120
    %20 = vst.msk [vmem:[#allocation2] sm:$0xff] %vm19, 0.0
    %21 = vst.msk [vmem:[#allocation2 + $0x8] sm:$0xff] %vm19, 0.0
  $region17: #{_lambda_.12} parent=0 // pred_fallthru
    _
  %v22 = vld [vmem:[#allocation2] sm:$0xff]
  %v23 = vld [vmem:[#allocation2 + $0x8] sm:$0xff]
  %v24 = vld [vmem:[%s0] sm:$0xf]
  %v25 = vld [vmem:[%s0 + $0x4] sm:$0xf]
  %v26 = vld [vmem:[%s1] sm:$0xf]
  %v27 = vld [vmem:[%s1 + $0x4] sm:$0xf]
  %v28 = vld [vmem:[%s1 + $0x8] sm:$0xf]
  %v29 = vld [vmem:[%s1 + $0xc] sm:$0xf]
  %v30 = vld [vmem:[%s1 + $0x10] sm:$0xf]
  %v31 = vld [vmem:[%s1 + $0x14] sm:$0xf]
  %v32 = vld [vmem:[%s1 + $0x18] sm:$0xf]
  %v33 = vld [vmem:[%s1 + $0x1c] sm:$0xf]
  %v36 = vunpack.c.l.b16 %v24
  %v37 = vunpack.c.l.b16 %v25
  %v38 = vpack.c.b16 %v37, %v36
  %v47 = vunpack.c.l.b16 %v26
  %v48 = vunpack.c.l.b16 %v27
  %v49 = vunpack.c.l.b16 %v28
  %v50 = vunpack.c.l.b16 %v29
  %v51 = vunpack.c.l.b16 %v30
  %v52 = vunpack.c.l.b16 %v31
  %v53 = vunpack.c.l.b16 %v32
  %v54 = vunpack.c.l.b16 %v33
  %v55 = vpack.c.b16 %v48, %v47
  %v56 = vpack.c.b16 %v50, %v49
  %v57 = vpack.c.b16 %v52, %v51
  %v58 = vpack.c.b16 %v54, %v53
  %vm63 = vcmask 523264
  %v65 = vsel %vm63, %v38, 0
  %67 = vmatprep.subr.bf16.mxu0 0
  %68 = vmatpush1.bf16.msra.mxu0 0
  %69 = vmatprep.subr.bf16.mxu0 0
  %70 = vmatpush1.bf16.msra.mxu0 0
  %71 = vmatprep.subr.bf16.mxu0 0
  %72 = vmatpush1.bf16.msra.mxu0 0
  %73 = vmatprep.subr.bf16.mxu0 0
  %74 = vmatpush1.bf16.msra.mxu0 0
  %75 = vmatprep.subr.bf16.mxu0 0
  %76 = vmatpush1.bf16.msra.mxu0 %v58
  %77 = vmatprep.subr.bf16.mxu0 0
  %78 = vmatpush1.bf16.msra.mxu0 %v57
  %79 = vmatprep.subr.bf16.mxu0 0
  %80 = vmatpush1.bf16.msra.mxu0 %v56
  %81 = vmatprep.subr.bf16.mxu0 0
  %82 = vmatpush1.bf16.msra.mxu0 %v55
  %83 = vmatprep.subr.bf16.mxu0 0
  %84 = vmatpush2.bf16.msra.mxu0 0
  %85 = vmatprep.subr.bf16.mxu0 0
  %86 = vmatpush2.bf16.msra.mxu0 0
  %87 = vmatprep.subr.bf16.mxu0 0
  %88 = vmatpush2.bf16.msra.mxu0 0
  %89 = vmatprep.subr.bf16.mxu0 0
  %90 = vmatpush2.bf16.msra.mxu0 0
  %91 = vmatprep.subr.bf16.mxu0 0
  %92 = vmatpush2.bf16.msra.mxu0 0
  %93 = vmatprep.subr.bf16.mxu0 0
  %94 = vmatpush2.bf16.msra.mxu0 0
  %95 = vmatprep.subr.bf16.mxu0 0
  %96 = vmatpush2.bf16.msra.mxu0 0
  %97 = vmatprep.subr.bf16.mxu0 0
  %98 = vmatpush2.bf16.msra.mxu0 0
  %99 = vmatprep.mubr.bf16.mxu0 0
  %100 = vmatmul.mubr.bf16.gmra.mxu0 %v65
  %v101 = vpop.f32.mrf.mxu0
  %v102 = vadd.f32 0.0, %v101
  %v103 = vpop.f32.mrf.mxu0
  %v104 = vpop.f32.mrf.mxu0
  %v105 = vadd.f32 0.0, %v104
  %v106 = vpop.f32.mrf.mxu0
  %107 = vdwg.mxu0
  %v108 = vadd.f32 %v22, %v102
  %v109 = vadd.f32 %v23, %v105
  %vm110 = vcmask 261120
  %111 = vst.msk [vmem:[#allocation2] sm:$0xff] %vm110, %v108
  %112 = vst.msk [vmem:[#allocation2 + $0x8] sm:$0xff] %vm110, %v109
  // Predicated region
  $region18: #{_lambda_.12} parent=0 // pred_check
    %p113 = pneg %p15
  $region19: #{_lambda_.12} parent=0 // pred_check_branch
    %115 = sbr.rel (%p113) target = $region21
  $region20: #{_lambda_.12} parent=0 // pred_region
    %v116 = vld [vmem:[#allocation2] sm:$0xff]
    %v117 = vld [vmem:[#allocation2 + $0x8] sm:$0xff]
    %v118 = vld [vmem:[%s2] sm:$0xff]
    %v119 = vld [vmem:[%s2 + $0x8] sm:$0xff]
    %v120 = vadd.f32 %v116, %v118
    %v121 = vadd.f32 %v117, %v119
    %122 = vst.msk [vmem:[%s3] sm:$0xff] %vm110, %v120
    %123 = vst.msk [vmem:[%s3 + $0x8] sm:$0xff] %vm110, %v121
  $region21: #{_lambda_.12} parent=0 // pred_fallthru
    _
  // Predicated region
  $region22: #{_lambda_.12} parent=0 // pred_check
    _
  $region23: #{_lambda_.12} parent=0 // pred_check_branch
    %125 = sbr.rel (0) target = $region25
  $region24: #{_lambda_.12} parent=0 // pred_region
    _
  $region25: #{_lambda_.12} parent=0 // pred_fallthru
    _
  // Predicated region
  $region26: #{_lambda_.12} parent=0 // pred_check
    _
  $region27: #{_lambda_.12} parent=0 // pred_check_branch
    %127 = sbr.rel (0) target = $region29
  $region28: #{_lambda_.12} parent=0 // pred_region
    _
  $region29: #{_lambda_.12} parent=0 // pred_fallthru
    _

// kernel: _lambda_.11
$region0: #{_lambda_.11}
  #allocation0 [shape = 'u32[]', space=smem, size = 0x4, offset = 0x4, fixed_abs, tag = 'smem constant byte address 0x4 - core index']
  #allocation1 [shape = 'u32[144,128]{1,0:T(1,128)}', space=vmem, size = 0x12000, scoped, tag = 'internal scratch']
  %s0 = inlined_call_operand.vmem [shape: f32[16,32], index: 0, kind: input, shape index: {}]
  %s1 = inlined_call_operand.vmem [shape: f32[1,32], index: 1, kind: input, shape index: {}]
  %s2 = inlined_call_operand.vmem [shape: bf16[32,64], index: 2, kind: input, shape index: {}]
  %s3 = inlined_call_operand.vmem [shape: bf16[32,64], index: 3, kind: input, shape index: {}]
  %s4 = inlined_call_operand.vmem [shape: bf16[16,64], index: 4, kind: output, shape index: {}]
  %s5 = sld [smem:[#allocation0]]
  $region26: #{_lambda_.11} parent=0
    _
  %s7 = ssub.s32 1, %s5
  %s8 = scalar_select 0, %s7, %s5
  // Predicated region
  $region2: #{_lambda_.11} parent=0 // pred_check
    _
  $region3: #{_lambda_.11} parent=0 // pred_check_branch
    %10 = sbr.rel (0) target = $region5
  $region4: #{_lambda_.11} parent=0 // pred_region
    _
  $region5: #{_lambda_.11} parent=0 // pred_fallthru
    _
  // Predicated region
  $region6: #{_lambda_.11} parent=0 // pred_check
    _
  $region7: #{_lambda_.11} parent=0 // pred_check_branch
    %12 = sbr.rel (0) target = $region9
  $region8: #{_lambda_.11} parent=0 // pred_region
    _
  $region9: #{_lambda_.11} parent=0 // pred_fallthru
    _
  // Predicated region
  $region10: #{_lambda_.11} parent=0 // pred_check
    _
  $region11: #{_lambda_.11} parent=0 // pred_check_branch
    %14 = sbr.rel (0) target = $region13
  $region12: #{_lambda_.11} parent=0 // pred_region
    _
  $region13: #{_lambda_.11} parent=0 // pred_fallthru
    _
  // Predicated region
  $region14: #{_lambda_.11} parent=0 // pred_check
    _
  $region15: #{_lambda_.11} parent=0 // pred_check_branch
    %16 = sbr.rel (0) target = $region17
  $region16: #{_lambda_.11} parent=0 // pred_region
    _
  $region17: #{_lambda_.11} parent=0 // pred_fallthru
    _
  %v18 = vld [vmem:[%s0] sm:$0xff]
  %v19 = vld [vmem:[%s0 + $0x8] sm:$0xff]
  %v20 = vmul.f32 %v18, %v18
  %v21 = vmul.f32 %v19, %v19
  %vm22 = vcmask 261120
  %v23 = vsel %vm22, %v20, 0.0
  %24 = vadd.xlane.f32.xlu0 %v23
  %v25 = vpop.xlane.xlu0 %24
  %v26 = vsel %vm22, %v21, 0.0
  %27 = vadd.xlane.f32.xlu0 %v26
  %v28 = vpop.xlane.xlu0 %27
  %v29 = vrcp.pop 32.0
  %v30 = vmul.f32 %v25, %v29
  %v31 = vmul.f32 %v28, %v29
  %v32 = vadd.f32 %v30, 1e-06
  %v33 = vadd.f32 %v31, 1e-06
  %v34 = vrsqrt.pop %v32
  %v35 = vrsqrt.pop %v33
  %v36 = vmul.f32 %v18, %v34
  %v37 = vmul.f32 %v19, %v35
  %v38 = vld [vmem:[%s1] sm:$0x1]
  %v40 = vlaneseq
  %v41 = vshrl.u32 %v40, 7
  %v42 = vsub.s32 0, %v41
  %v43 = vrot.slane %v38, %v42
  %v45 = vmul.f32 %v36, %v43
  %v46 = vmul.f32 %v37, %v43
  %v47 = vpack.c.bf16 %v46, %v45
  %v48 = vld [vmem:[%s2] sm:$0xf]
  %v49 = vld [vmem:[%s2 + $0x4] sm:$0xf]
  %v50 = vld [vmem:[%s2 + $0x8] sm:$0xf]
  %v51 = vld [vmem:[%s2 + $0xc] sm:$0xf]
  %v56 = vunpack.c.l.b16 %v48
  %v57 = vunpack.c.l.b16 %v49
  %v58 = vunpack.c.l.b16 %v50
  %v59 = vunpack.c.l.b16 %v51
  %v60 = vpack.c.b16 %v57, %v56
  %v61 = vpack.c.b16 %v59, %v58
  %v65 = vsel %vm22, %v47, 0
  %67 = vmatprep.subr.bf16.mxu0 0
  %68 = vmatpush1.bf16.msra.mxu0 0
  %69 = vmatprep.subr.bf16.mxu0 0
  %70 = vmatpush1.bf16.msra.mxu0 0
  %71 = vmatprep.subr.bf16.mxu0 0
  %72 = vmatpush1.bf16.msra.mxu0 0
  %73 = vmatprep.subr.bf16.mxu0 0
  %74 = vmatpush1.bf16.msra.mxu0 0
  %75 = vmatprep.subr.bf16.mxu0 0
  %76 = vmatpush1.bf16.msra.mxu0 0
  %77 = vmatprep.subr.bf16.mxu0 0
  %78 = vmatpush1.bf16.msra.mxu0 0
  %79 = vmatprep.subr.bf16.mxu0 0
  %80 = vmatpush1.bf16.msra.mxu0 %v61
  %81 = vmatprep.subr.bf16.mxu0 0
  %82 = vmatpush1.bf16.msra.mxu0 %v60
  %83 = vmatprep.subr.bf16.mxu0 0
  %84 = vmatpush2.bf16.msra.mxu0 0
  %85 = vmatprep.subr.bf16.mxu0 0
  %86 = vmatpush2.bf16.msra.mxu0 0
  %87 = vmatprep.subr.bf16.mxu0 0
  %88 = vmatpush2.bf16.msra.mxu0 0
  %89 = vmatprep.subr.bf16.mxu0 0
  %90 = vmatpush2.bf16.msra.mxu0 0
  %91 = vmatprep.subr.bf16.mxu0 0
  %92 = vmatpush2.bf16.msra.mxu0 0
  %93 = vmatprep.subr.bf16.mxu0 0
  %94 = vmatpush2.bf16.msra.mxu0 0
  %95 = vmatprep.subr.bf16.mxu0 0
  %96 = vmatpush2.bf16.msra.mxu0 0
  %97 = vmatprep.subr.bf16.mxu0 0
  %98 = vmatpush2.bf16.msra.mxu0 0
  %99 = vmatprep.mubr.bf16.mxu0 0
  %100 = vmatmul.mubr.bf16.gmra.mxu0 %v65
  %v101 = vpop.f32.mrf.mxu0
  %v102 = vadd.f32 0.0, %v101
  %v103 = vpop.f32.mrf.mxu0
  %v104 = vpop.f32.mrf.mxu0
  %v105 = vadd.f32 0.0, %v104
  %v106 = vpop.f32.mrf.mxu0
  %107 = vdwg.mxu0
  %v108 = vld [vmem:[%s3] sm:$0xf]
  %v109 = vld [vmem:[%s3 + $0x4] sm:$0xf]
  %v110 = vld [vmem:[%s3 + $0x8] sm:$0xf]
  %v111 = vld [vmem:[%s3 + $0xc] sm:$0xf]
  %v116 = vunpack.c.l.b16 %v108
  %v117 = vunpack.c.l.b16 %v109
  %v118 = vunpack.c.l.b16 %v110
  %v119 = vunpack.c.l.b16 %v111
  %v120 = vpack.c.b16 %v117, %v116
  %v121 = vpack.c.b16 %v119, %v118
  %124 = vmatprep.subr.bf16.mxu0 0
  %125 = vmatpush1.bf16.msra.mxu0 0
  %126 = vmatprep.subr.bf16.mxu0 0
  %127 = vmatpush1.bf16.msra.mxu0 0
  %128 = vmatprep.subr.bf16.mxu0 0
  %129 = vmatpush1.bf16.msra.mxu0 0
  %130 = vmatprep.subr.bf16.mxu0 0
  %131 = vmatpush1.bf16.msra.mxu0 0
  %132 = vmatprep.subr.bf16.mxu0 0
  %133 = vmatpush1.bf16.msra.mxu0 0
  %134 = vmatprep.subr.bf16.mxu0 0
  %135 = vmatpush1.bf16.msra.mxu0 0
  %136 = vmatprep.subr.bf16.mxu0 0
  %137 = vmatpush1.bf16.msra.mxu0 %v121
  %138 = vmatprep.subr.bf16.mxu0 0
  %139 = vmatpush1.bf16.msra.mxu0 %v120
  %140 = vmatprep.subr.bf16.mxu0 0
  %141 = vmatpush2.bf16.msra.mxu0 0
  %142 = vmatprep.subr.bf16.mxu0 0
  %143 = vmatpush2.bf16.msra.mxu0 0
  %144 = vmatprep.subr.bf16.mxu0 0
  %145 = vmatpush2.bf16.msra.mxu0 0
  %146 = vmatprep.subr.bf16.mxu0 0
  %147 = vmatpush2.bf16.msra.mxu0 0
  %148 = vmatprep.subr.bf16.mxu0 0
  %149 = vmatpush2.bf16.msra.mxu0 0
  %150 = vmatprep.subr.bf16.mxu0 0
  %151 = vmatpush2.bf16.msra.mxu0 0
  %152 = vmatprep.subr.bf16.mxu0 0
  %153 = vmatpush2.bf16.msra.mxu0 0
  %154 = vmatprep.subr.bf16.mxu0 0
  %155 = vmatpush2.bf16.msra.mxu0 0
  %156 = vmatprep.mubr.bf16.mxu0 0
  %157 = vmatmul.mubr.bf16.gmra.mxu0 %v65
  %v158 = vpop.f32.mrf.mxu0
  %v159 = vadd.f32 0.0, %v158
  %v160 = vpop.f32.mrf.mxu0
  %v161 = vpop.f32.mrf.mxu0
  %v162 = vadd.f32 0.0, %v161
  %v163 = vpop.f32.mrf.mxu0
  %164 = vdwg.mxu0
  %v165 = vxor.u32 %v102, 2147483648
  %v166 = vxor.u32 %v105, 2147483648
  %v167 = vmul.f32 %v165, 1.442695
  %v168 = vpow.pop %v167
  %v169 = vmul.f32 %v166, 1.442695
  %v170 = vpow.pop %v169
  %v171 = vadd.f32 %v168, 1.0
  %v172 = vadd.f32 %v170, 1.0
  %v173 = vrcp.pop %v171
  %v174 = vmul.f32 1.0, %v173
  %v175 = vrcp.pop %v172
  %v176 = vmul.f32 1.0, %v175
  %v177 = vmul.f32 %v102, %v174
  %v178 = vmul.f32 %v105, %v176
  %v179 = vmul.f32 %v177, %v159
  %v180 = vmul.f32 %v178, %v162
  %v181 = vpack.c.bf16 %v180, %v179
  %v183 = vunpack.c.l.b16 %v181
  %v184 = vunpack.c.h.b16 %v181
  %v185 = vpack.c.b16 %v183, %v183
  %v186 = vpack.c.b16 %v184, %v184
  %vm189 = vcmask 519168
  %190 = vst.msk [vmem:[%s4] sm:$0xf] %vm189, %v185
  %191 = vst.msk [vmem:[%s4 + $0x4] sm:$0xf] %vm189, %v186
  // Predicated region
  $region18: #{_lambda_.11} parent=0 // pred_check
    _
  $region19: #{_lambda_.11} parent=0 // pred_check_branch
    %193 = sbr.rel (0) target = $region21
  $region20: #{_lambda_.11} parent=0 // pred_region
    _
  $region21: #{_lambda_.11} parent=0 // pred_fallthru
    _
  // Predicated region
  $region22: #{_lambda_.11} parent=0 // pred_check
    _
  $region23: #{_lambda_.11} parent=0 // pred_check_branch
    %195 = sbr.rel (0) target = $region25
  $region24: #{_lambda_.11} parent=0 // pred_region
    _
  $region25: #{_lambda_.11} parent=0 // pred_fallthru
    _

// kernel: _lambda_.13
$region0: #{_lambda_.13}
  #allocation0 [shape = 'u32[]', space=smem, size = 0x4, offset = 0x4, fixed_abs, tag = 'smem constant byte address 0x4 - core index']
  #allocation1 [shape = 'u32[144,128]{1,0:T(1,128)}', space=vmem, size = 0x12000, scoped, tag = 'internal scratch']
  #allocation2 [shape = 'bf16[16,32]{1,0:T(8,128)(2,1)}', space=vmem, size = 0x1000, scoped, tag = 'scratch operand']
  #allocation3 [shape = 'f32[16,1]{1,0:T(8,128)}', space=vmem, size = 0x2000, scoped, tag = 'scratch operand']
  #allocation4 [shape = 'f32[16,1]{1,0:T(8,128)}', space=vmem, size = 0x2000, scoped, tag = 'scratch operand']
  #allocation5 [shape = 'f32[16,1]{1,0:T(8,128)}', space=vmem, size = 0x2000, scoped, tag = 'scratch operand']
  %s0 = inlined_call_operand.vmem [shape: f32[16,32], index: 0, kind: input, shape index: {}]
  %s1 = inlined_call_operand.vmem [shape: f32[1,32], index: 1, kind: input, shape index: {}]
  %s2 = inlined_call_operand.vmem [shape: bf16[32,64], index: 2, kind: input, shape index: {}]
  %s3 = inlined_call_operand.vmem [shape: s32[16,1], index: 3, kind: input, shape index: {}]
  %s4 = inlined_call_operand.hbm [shape: f32[16,64], index: 4, kind: output, shape index: {0}]
  %s5 = inlined_call_operand.vmem [shape: f32[16,1], index: 5, kind: output, shape index: {1}]
  %6 = xla_tuple %s4, %s5
  %s7 = sld [smem:[#allocation0]]
  $region42: #{_lambda_.13} parent=0
    _
  %s9 = ssub.s32 1, %s7
  %s10 = scalar_select 0, %s9, %s7
  $region1: #{_lambda_.13} parent=0
    #allocation6 [shape = 'u8[8192]{0}', space=vmem, size = 0x2000, scoped, tag = 'output window, operand 0, single buffered']
    #allocation7 [shape = 's32[1]{0}', space=sflag, size = 0x4, scoped, tag = 'scoped memory for _lambda_.13']
    %11 = vsyncpa [#allocation7], 0
    // Predicated region
    $region2: #{_lambda_.13} parent=1 // pred_check
      _
    $region3: #{_lambda_.13} parent=1 // pred_check_branch
      %13 = sbr.rel (0) target = $region5
    $region4: #{_lambda_.13} parent=1 // pred_region
      _
    $region5: #{_lambda_.13} parent=1 // pred_fallthru
      _
    // Predicated region
    $region6: #{_lambda_.13} parent=1 // pred_check
      _
    $region7: #{_lambda_.13} parent=1 // pred_check_branch
      %15 = sbr.rel (0) target = $region9
    $region8: #{_lambda_.13} parent=1 // pred_region
      _
    $region9: #{_lambda_.13} parent=1 // pred_fallthru
      _
    // Predicated region
    $region10: #{_lambda_.13} parent=1 // pred_check
      _
    $region11: #{_lambda_.13} parent=1 // pred_check_branch
      %17 = sbr.rel (0) target = $region13
    $region12: #{_lambda_.13} parent=1 // pred_region
      _
    $region13: #{_lambda_.13} parent=1 // pred_fallthru
      _
    // Predicated region
    $region14: #{_lambda_.13} parent=1 // pred_check
      _
    $region15: #{_lambda_.13} parent=1 // pred_check_branch
      %19 = sbr.rel (0) target = $region17
    $region16: #{_lambda_.13} parent=1 // pred_region
      _
    $region17: #{_lambda_.13} parent=1 // pred_fallthru
      _
    %p21 = scmp.eq.s32.totalorder 0, 0
    // Predicated region
    $region18: #{_lambda_.13} parent=1 // pred_check
      %p22 = pneg %p21
    $region19: #{_lambda_.13} parent=1 // pred_check_branch
      %24 = sbr.rel (%p22) target = $region21
    $region20: #{_lambda_.13} parent=1 // pred_region
      %v25 = vld [vmem:[%s0] sm:$0xff]
      %v26 = vld [vmem:[%s0 + $0x8] sm:$0xff]
      %v27 = vmul.f32 %v25, %v25
      %v28 = vmul.f32 %v26, %v26
      %vm29 = vcmask 261120
      %v30 = vsel %vm29, %v27, 0.0
      %31 = vadd.xlane.f32.xlu0 %v30
      %v32 = vpop.xlane.xlu0 %31
      %v33 = vsel %vm29, %v28, 0.0
      %34 = vadd.xlane.f32.xlu0 %v33
      %v35 = vpop.xlane.xlu0 %34
      %v36 = vrcp.pop 32.0
      %v37 = vmul.f32 %v32, %v36
      %v38 = vmul.f32 %v35, %v36
      %v39 = vadd.f32 %v37, 1e-06
      %v40 = vadd.f32 %v38, 1e-06
      %v41 = vrsqrt.pop %v39
      %v42 = vrsqrt.pop %v40
      %v43 = vmul.f32 %v25, %v41
      %v44 = vmul.f32 %v26, %v42
      %v45 = vld [vmem:[%s1] sm:$0x1]
      %v47 = vlaneseq
      %v48 = vshrl.u32 %v47, 7
      %v49 = vsub.s32 0, %v48
      %v50 = vrot.slane %v45, %v49
      %v52 = vmul.f32 %v43, %v50
      %v53 = vmul.f32 %v44, %v50
      %v54 = vpack.c.bf16 %v53, %v52
      %v56 = vunpack.c.l.b16 %v54
      %v57 = vunpack.c.h.b16 %v54
      %v58 = vpack.c.b16 %v56, %v56
      %v59 = vpack.c.b16 %v57, %v57
      %vm62 = vcmask 257024
      %63 = vst.msk [vmem:[#allocation2] sm:$0xf] %vm62, %v58
      %64 = vst.msk [vmem:[#allocation2 + $0x4] sm:$0xf] %vm62, %v59
      %vm65 = vcmask 7168
      %66 = vst.msk [vmem:[#allocation3] sm:$0xff] %vm65, -1e+30
      %67 = vst.msk [vmem:[#allocation3 + $0x8] sm:$0xff] %vm65, -1e+30
      %68 = vst.msk [vmem:[#allocation4] sm:$0xff] %vm65, 0.0
      %69 = vst.msk [vmem:[#allocation4 + $0x8] sm:$0xff] %vm65, 0.0
      %70 = vst.msk [vmem:[#allocation5] sm:$0xff] %vm65, 0.0
      %71 = vst.msk [vmem:[#allocation5 + $0x8] sm:$0xff] %vm65, 0.0
    $region21: #{_lambda_.13} parent=1 // pred_fallthru
      _
    %v72 = vld [vmem:[#allocation2] sm:$0xf]
    %v73 = vld [vmem:[#allocation2 + $0x4] sm:$0xf]
    %v74 = vld [vmem:[%s2] sm:$0xf]
    %v75 = vld [vmem:[%s2 + $0x4] sm:$0xf]
    %v76 = vld [vmem:[%s2 + $0x8] sm:$0xf]
    %v77 = vld [vmem:[%s2 + $0xc] sm:$0xf]
    %v80 = vunpack.c.l.b16 %v72
    %v81 = vunpack.c.l.b16 %v73
    %v82 = vpack.c.b16 %v81, %v80
    %v87 = vunpack.c.l.b16 %v74
    %v88 = vunpack.c.l.b16 %v75
    %v89 = vunpack.c.l.b16 %v76
    %v90 = vunpack.c.l.b16 %v77
    %v91 = vpack.c.b16 %v88, %v87
    %v92 = vpack.c.b16 %v90, %v89
    %vm95 = vcmask 261120
    %v97 = vsel %vm95, %v82, 0
    %99 = vmatprep.subr.bf16.mxu0 0
    %100 = vmatpush1.bf16.msra.mxu0 0
    %101 = vmatprep.subr.bf16.mxu0 0
    %102 = vmatpush1.bf16.msra.mxu0 0
    %103 = vmatprep.subr.bf16.mxu0 0
    %104 = vmatpush1.bf16.msra.mxu0 0
    %105 = vmatprep.subr.bf16.mxu0 0
    %106 = vmatpush1.bf16.msra.mxu0 0
    %107 = vmatprep.subr.bf16.mxu0 0
    %108 = vmatpush1.bf16.msra.mxu0 0
    %109 = vmatprep.subr.bf16.mxu0 0
    %110 = vmatpush1.bf16.msra.mxu0 0
    %111 = vmatprep.subr.bf16.mxu0 0
    %112 = vmatpush1.bf16.msra.mxu0 %v92
    %113 = vmatprep.subr.bf16.mxu0 0
    %114 = vmatpush1.bf16.msra.mxu0 %v91
    %115 = vmatprep.subr.bf16.mxu0 0
    %116 = vmatpush2.bf16.msra.mxu0 0
    %117 = vmatprep.subr.bf16.mxu0 0
    %118 = vmatpush2.bf16.msra.mxu0 0
    %119 = vmatprep.subr.bf16.mxu0 0
    %120 = vmatpush2.bf16.msra.mxu0 0
    %121 = vmatprep.subr.bf16.mxu0 0
    %122 = vmatpush2.bf16.msra.mxu0 0
    %123 = vmatprep.subr.bf16.mxu0 0
    %124 = vmatpush2.bf16.msra.mxu0 0
    %125 = vmatprep.subr.bf16.mxu0 0
    %126 = vmatpush2.bf16.msra.mxu0 0
    %127 = vmatprep.subr.bf16.mxu0 0
    %128 = vmatpush2.bf16.msra.mxu0 0
    %129 = vmatprep.subr.bf16.mxu0 0
    %130 = vmatpush2.bf16.msra.mxu0 0
    %131 = vmatprep.mubr.bf16.mxu0 0
    %132 = vmatmul.mubr.bf16.gmra.mxu0 %v97
    %v133 = vpop.f32.mrf.mxu0
    %v134 = vadd.f32 0.0, %v133
    %v135 = vpop.f32.mrf.mxu0
    %v136 = vpop.f32.mrf.mxu0
    %v137 = vadd.f32 0.0, %v136
    %v138 = vpop.f32.mrf.mxu0
    %139 = vdwg.mxu0
    %vm140 = vcmask 523264
    %141 = vst.msk [vmem:[#allocation6] sm:$0xff] %vm140, %v134
    %142 = vst.msk [vmem:[#allocation6 + $0x8] sm:$0xff] %vm140, %v137
    %v143 = vld [vmem:[#allocation3] sm:$0xff]
    %v144 = vld [vmem:[#allocation3 + $0x8] sm:$0xff]
    %v145 = vsel %vm140, %v134, -inf
    %146 = vmax.xlane.f32.xlu0 %v145
    %v147 = vpop.xlane.xlu0 %146
    %v148 = vsel %vm140, %v137, -inf
    %149 = vmax.xlane.f32.xlu0 %v148
    %v150 = vpop.xlane.xlu0 %149
    %v151 = vmax.f32 %v143, %v147
    %v152 = vmax.f32 %v144, %v150
    %v153 = vsub.f32 %v143, %v151
    %v154 = vsub.f32 %v144, %v152
    %v155 = vmul.f32 %v153, 1.442695
    %v156 = vpow.pop %v155
    %v157 = vmul.f32 %v154, 1.442695
    %v158 = vpow.pop %v157
    %v159 = vld [vmem:[#allocation4] sm:$0xff]
    %v160 = vld [vmem:[#allocation4 + $0x8] sm:$0xff]
    %v161 = vmul.f32 %v156, %v159
    %v162 = vmul.f32 %v158, %v160
    %164 = vset.pattern.permute.xlu0 0
    %165 = vperm.xlu0 %164, %v151
    %v166 = vpop.permute.xlu0 %165
    %169 = vset.pattern.permute.xlu0 0
    %170 = vperm.xlu0 %169, %v152
    %v171 = vpop.permute.xlu0 %170
    %v173 = vsub.f32 %v134, %v166
    %v174 = vsub.f32 %v137, %v171
    %v175 = vmul.f32 %v173, 1.442695
    %v176 = vpow.pop %v175
    %v177 = vmul.f32 %v174, 1.442695
    %v178 = vpow.pop %v177
    %v179 = vsel %vm140, %v176, 0.0
    %180 = vadd.xlane.f32.xlu0 %v179
    %v181 = vpop.xlane.xlu0 %180
    %v182 = vsel %vm140, %v178, 0.0
    %183 = vadd.xlane.f32.xlu0 %v182
    %v184 = vpop.xlane.xlu0 %183
    %v185 = vadd.f32 %v161, %v181
    %v186 = vadd.f32 %v162, %v184
    %vm187 = vcmask 7168
    %188 = vst.msk [vmem:[#allocation4] sm:$0xff] %vm187, %v185
    %189 = vst.msk [vmem:[#allocation4 + $0x8] sm:$0xff] %vm187, %v186
    %190 = vst.msk [vmem:[#allocation3] sm:$0xff] %vm187, %v151
    %191 = vst.msk [vmem:[#allocation3 + $0x8] sm:$0xff] %vm187, %v152
    %s192 = smul.u32 0, 64
    %v193 = vlaneseq
    %v194 = vand.u32 %v193, 127
    %v195 = vstv %s192
    %v196 = vadd.s32 %v195, %v194
    %v197 = vld [vmem:[#allocation5] sm:$0xff]
    %v198 = vld [vmem:[#allocation5 + $0x8] sm:$0xff]
    %v199 = vld [vmem:[%s3] sm:$0xff]
    %v200 = vld [vmem:[%s3 + $0x8] sm:$0xff]
    %201 = vset.pattern.permute.xlu0 0
    %202 = vperm.xlu0 %201, %v199
    %v203 = vpop.permute.xlu0 %202
    %204 = vset.pattern.permute.xlu0 0
    %205 = vperm.xlu0 %204, %v200
    %v206 = vpop.permute.xlu0 %205
    %vm207 = vcmp.eq.s32.totalorder %v196, %v203
    %vm208 = vcmp.eq.s32.totalorder %v196, %v206
    %v209 = vsel %vm207, %v134, 0.0
    %v210 = vsel %vm208, %v137, 0.0
    %v211 = vsel %vm140, %v209, 0.0
    %212 = vadd.xlane.f32.xlu0 %v211
    %v213 = vpop.xlane.xlu0 %212
    %v214 = vsel %vm140, %v210, 0.0
    %215 = vadd.xlane.f32.xlu0 %v214
    %v216 = vpop.xlane.xlu0 %215
    %v217 = vadd.f32 %v197, %v213
    %v218 = vadd.f32 %v198, %v216
    %219 = vst.msk [vmem:[#allocation5] sm:$0xff] %vm187, %v217
    %220 = vst.msk [vmem:[#allocation5 + $0x8] sm:$0xff] %vm187, %v218
    // Predicated region
    $region22: #{_lambda_.13} parent=1 // pred_check
      %p221 = pneg %p21
    $region23: #{_lambda_.13} parent=1 // pred_check_branch
      %223 = sbr.rel (%p221) target = $region25
    $region24: #{_lambda_.13} parent=1 // pred_region
      %v224 = vld [vmem:[#allocation3] sm:$0xff]
      %v225 = vld [vmem:[#allocation3 + $0x8] sm:$0xff]
      %v226 = vld [vmem:[#allocation4] sm:$0xff]
      %v227 = vld [vmem:[#allocation4 + $0x8] sm:$0xff]
      %v228 = vlog2.pop %v226
      %v229 = vmul.f32 %v228, 0.6931472
      %v230 = vlog2.pop %v227
      %v231 = vmul.f32 %v230, 0.6931472
      %v232 = vadd.f32 %v224, %v229
      %v233 = vadd.f32 %v225, %v231
      %v234 = vld [vmem:[#allocation5] sm:$0xff]
      %v235 = vld [vmem:[#allocation5 + $0x8] sm:$0xff]
      %v236 = vsub.f32 %v232, %v234
      %v237 = vsub.f32 %v233, %v235
      %238 = vst.msk [vmem:[%s5] sm:$0xff] %vm187, %v236
      %239 = vst.msk [vmem:[%s5 + $0x8] sm:$0xff] %vm187, %v237
    $region25: #{_lambda_.13} parent=1 // pred_fallthru
      _
    // Predicated region
    $region26: #{_lambda_.13} parent=1 // pred_check
      _
    $region27: #{_lambda_.13} parent=1 // pred_check_branch
      %241 = sbr.rel (0) target = $region29
    $region28: #{_lambda_.13} parent=1 // pred_region
      %s243 = ssub.s32 256, 256
      %244 = vsyncadd [#allocation7], %s243
      %s245 = sshll.u32 [#allocation6], 4
      %s246 = int_to_ptr.vmem [resolvable:$true] %s245
      %251 = dma.vmem_to_hbm [thread:$0]  %s246, 256, %s4, [#allocation7], 128, 128, 8
    $region29: #{_lambda_.13} parent=1 // pred_fallthru
      _
    // Predicated region
    $region30: #{_lambda_.13} parent=1 // pred_check
      _
    $region31: #{_lambda_.13} parent=1 // pred_check_branch
      %253 = sbr.rel (0) target = $region33
    $region32: #{_lambda_.13} parent=1 // pred_region
      _
    $region33: #{_lambda_.13} parent=1 // pred_fallthru
      _
    // Predicated region
    $region34: #{_lambda_.13} parent=1 // pred_check
      _
    $region35: #{_lambda_.13} parent=1 // pred_check_branch
      %255 = sbr.rel (0) target = $region37
    $region36: #{_lambda_.13} parent=1 // pred_region
      %256 = dma.done [#allocation7], 256
    $region37: #{_lambda_.13} parent=1 // pred_fallthru
      _
    // Predicated region
    $region38: #{_lambda_.13} parent=1 // pred_check
      _
    $region39: #{_lambda_.13} parent=1 // pred_check_branch
      %258 = sbr.rel (0) target = $region41
    $region40: #{_lambda_.13} parent=1 // pred_region
      _
    $region41: #{_lambda_.13} parent=1 // pred_fallthru
      _
    %259 = vsyncpa [#allocation7], 1

</llo_original>
